<compile_context>
chip_gen: v7x
topology: tpu7x:2x2x1
jax: 0.10.0
libtpu: 0.0.40
codegen_flags: <defaults>
</compile_context>

<pallas_src>
import jax
import jax.numpy as jnp
from jax.experimental import pallas as pl
from jax.experimental.pallas import tpu as pltpu

_LANE = 128


def _leaky_relu(x, slope=0.01):
    return jnp.where(x > 0, x, slope * x)


def _cdiv(a, b):
    return -(-a // b)


def _round_up(v, m):
    return _cdiv(v, m) * m


def policy_kernel(xT_ref, w1_ref, b1_ref, w2_ref, b2_ref, w3_ref, b3_ref, meanT_ref):
    # One (dim_state, TB) batch tile per grid step; weights/biases stay VMEM-resident
    # (constant index_map).  Batch is on the lane axis -> all stores are lane-dense.
    xT = xT_ref[...]                                                        # (S, TB)

    h = jnp.dot(w1_ref[...], xT, preferred_element_type=jnp.float32) + b1_ref[...]
    h = _leaky_relu(h)                                                      # (H, TB)

    h = jnp.dot(w2_ref[...], h, preferred_element_type=jnp.float32) + b2_ref[...]
    h = _leaky_relu(h)                                                      # (H, TB)

    meanT_ref[...] = (
        jnp.dot(w3_ref[...], h, preferred_element_type=jnp.float32) + b3_ref[...]
    )                                                                       # (A, TB)


def _mlp_jnp(x, p):
    # Pure-JAX math: reference AND the short-circuit path for tiny batches.
    h = _leaky_relu(x @ p["w1"].T + p["b1"].T)
    h = _leaky_relu(h @ p["w2"].T + p["b2"].T)
    return h @ p["w3"].T + p["b3"].T


def policy_forward(x, params, *, max_tile=8192, min_pallas_batch=256):
    """Returns (mean, std) of the Normal distribution produced by Policy.forward."""
    B, dim_state = x.shape
    dim_hidden = params["w1"].shape[0]
    dim_action = params["w3"].shape[0]

    # Tiny batches: the pallas_call launch + single small DMA dominates; XLA's fused
    # dot+elementwise is at least as fast and avoids the custom-call boundary.
    if B < min_pallas_batch:
        mean = _mlp_jnp(x, params)
        std = jnp.broadcast_to(jnp.exp(params["log_std"]), mean.shape)
        return mean, std

    # ---- batch tiling (batch on the lane axis) --------------------------------------
    # Pad B only to the 128-lane quantum, then pick roughly equal tiles (each a multiple
    # of 128 lanes).  A single large tile is split into 2 so the ("parallel",) grid axis
    # can shard across both TensorCores on v7x.
    B_pad = _round_up(B, _LANE)
    num_tiles = max(1, _cdiv(B_pad, max_tile))
    if num_tiles == 1 and B_pad >= 2048:
        num_tiles = 2
    TB = _round_up(_cdiv(B_pad, num_tiles), _LANE)
    B_grid = num_tiles * TB

    xT = x.T                                                        # (dim_state, B)
    if B_grid != B:
        xT = jnp.pad(xT, ((0, 0), (0, B_grid - B)))

    # ---- explicit VMEM budget (v5e default scoped VMEM is only 16 MiB; v7x physical
    # VMEM is 64 MiB, so cap at 48 MiB) ------------------------------------------------
    itemsize = 4
    x_tile_b = dim_state * TB * itemsize
    out_tile_b = dim_action * TB * itemsize
    h_b = dim_hidden * TB * itemsize
    w_b = (dim_hidden * dim_state + dim_hidden * dim_hidden
           + dim_action * dim_hidden + 2 * dim_hidden + dim_action) * itemsize
    vmem_raw = 2 * (x_tile_b + out_tile_b) + 2 * h_b + 2 * w_b
    vmem_limit = int(min(max(int(1.5 * vmem_raw) + (2 << 20), 8 << 20), 48 << 20))

    const = lambda shape: pl.BlockSpec(shape, lambda i: (0, 0))

    meanT = pl.pallas_call(
        policy_kernel,
        out_shape=jax.ShapeDtypeStruct((dim_action, B_grid), jnp.float32),
        grid=(num_tiles,),
        in_specs=[
            pl.BlockSpec((dim_state, TB), lambda i: (0, i)),        # xT tile
            const((dim_hidden, dim_state)),                         # W1 (resident)
            const((dim_hidden, 1)),                                 # b1
            const((dim_hidden, dim_hidden)),                        # W2
            const((dim_hidden, 1)),                                 # b2
            const((dim_action, dim_hidden)),                        # W3
            const((dim_action, 1)),                                 # b3
        ],
        out_specs=pl.BlockSpec((dim_action, TB), lambda i: (0, i)),
        compiler_params=pltpu.CompilerParams(
            dimension_semantics=("parallel",),
            vmem_limit_bytes=vmem_limit,
        ),
    )(xT, params["w1"], params["b1"], params["w2"], params["b2"],
      params["w3"], params["b3"])

    mean = meanT[:, :B].T                                           # (B, dim_action)

    # std = exp(log_std.expand_as(mean)) -- x-independent, hoisted out of the kernel.
    std = jnp.broadcast_to(jnp.exp(params["log_std"]), (B, dim_action))
    return mean, std


def init_params(key, dim_state, dim_hidden, dim_action, log_std_init=0.0):
    """Deterministic synthetic init mirroring Policy.__init__:
       xavier_normal_ on Linear weights (PyTorch (out, in) layout), zero biases
       (stored (out, 1)), log_std = log_std_init."""
    def xavier_normal(k, fan_out, fan_in):
        std = jnp.sqrt(2.0 / (fan_in + fan_out))
        return std * jax.random.normal(k, (fan_out, fan_in), dtype=jnp.float32)

    k1, k2, k3 = jax.random.split(key, 3)
    return {
        "w1": xavier_normal(k1, dim_hidden, dim_state),
        "b1": jnp.zeros((dim_hidden, 1), jnp.float32),
        "w2": xavier_normal(k2, dim_hidden, dim_hidden),
        "b2": jnp.zeros((dim_hidden, 1), jnp.float32),
        "w3": xavier_normal(k3, dim_action, dim_hidden),
        "b3": jnp.zeros((dim_action, 1), jnp.float32),
        "log_std": jnp.full((1, dim_action), log_std_init, jnp.float32),
    }


def reference_forward(x, p):
    mean = _mlp_jnp(x, p)
    std = jnp.exp(jnp.broadcast_to(p["log_std"], mean.shape))
    return mean, std


if __name__ == "__main__":
    # Small shapes consistent with the module's MLP forward.
    dim_state, dim_hidden, dim_action = 16, 32, 4

    key = jax.random.PRNGKey(0)
    k_param, k_a, k_b, k_c = jax.random.split(key, 4)
    params = init_params(k_param, dim_state, dim_hidden, dim_action)

    # 1) Tiny batch -> plain-jnp short-circuit path.
    x_small = jax.random.normal(k_a, (8, dim_state), dtype=jnp.float32)
    mean_s, std_s = policy_forward(x_small, params)
    jax.block_until_ready((mean_s, std_s))
    mean_s_ref, std_s_ref = reference_forward(x_small, params)
    assert jnp.allclose(mean_s, mean_s_ref, atol=1e-5, rtol=1e-5)
    assert jnp.allclose(std_s, std_s_ref, atol=1e-5, rtol=1e-5)

    # 2) Pallas path, single tile: B=1030 pads to 1152 lanes, one grid step.
    x1 = jax.random.normal(k_b, (1030, dim_state), dtype=jnp.float32)
    mean1, std1 = policy_forward(x1, params)
    jax.block_until_ready((mean1, std1))
    mean1_ref, std1_ref = reference_forward(x1, params)
    assert jnp.allclose(mean1, mean1_ref, atol=1e-5, rtol=1e-5)
    assert jnp.allclose(std1, std1_ref, atol=1e-5, rtol=1e-5)

    # 3) Pallas path, multi-tile grid (max_tile forced small): B=3000 -> 3 tiles of 1024.
    x2 = jax.random.normal(k_c, (3000, dim_state), dtype=jnp.float32)
    mean2, std2 = policy_forward(x2, params, max_tile=1024)
    jax.block_until_ready((mean2, std2))
    mean2_ref, std2_ref = reference_forward(x2, params)
    assert jnp.allclose(mean2, mean2_ref, atol=1e-5, rtol=1e-5)
    assert jnp.allclose(std2, std2_ref, atol=1e-5, rtol=1e-5)

    # TODO(synk): Normal-distribution methods (sample / log_prob / entropy / kl) are pure
    # elementwise math on (mean, std) and are left to XLA rather than a Pallas kernel.
    print("KERNEL_OK")
</pallas_src>

<mosaic_0001>
module attributes {stable_mosaic.version = 11 : i64} {
  func.func @policy_kernel(%arg0: i32, %arg1: memref<16x1152xf32, #tpu.memory_space<vmem>>, %arg2: memref<32x16xf32, #tpu.memory_space<vmem>>, %arg3: memref<32x1xf32, #tpu.memory_space<vmem>>, %arg4: memref<32x32xf32, #tpu.memory_space<vmem>>, %arg5: memref<32x1xf32, #tpu.memory_space<vmem>>, %arg6: memref<4x32xf32, #tpu.memory_space<vmem>>, %arg7: memref<4x1xf32, #tpu.memory_space<vmem>>, %arg8: memref<4x1152xf32, #tpu.memory_space<vmem>>) attributes {dimension_semantics = [#tpu.dimension_semantics<parallel>], iteration_bounds = array<i64: 1>, scalar_prefetch = 0 : i64, scratch_operands = 0 : i64, tpu.core_type = #tpu.core_type<tc>, window_params = [{transform_indices = @transform_0, window_bounds = array<i64: 16, 1152>}, {pipeline_mode = #tpu.pipeline_mode<synchronous>, transform_indices = @transform_1, window_bounds = array<i64: 32, 16>}, {pipeline_mode = #tpu.pipeline_mode<synchronous>, transform_indices = @transform_2, window_bounds = array<i64: 32, 1>}, {pipeline_mode = #tpu.pipeline_mode<synchronous>, transform_indices = @transform_3, window_bounds = array<i64: 32, 32>}, {pipeline_mode = #tpu.pipeline_mode<synchronous>, transform_indices = @transform_4, window_bounds = array<i64: 32, 1>}, {pipeline_mode = #tpu.pipeline_mode<synchronous>, transform_indices = @transform_5, window_bounds = array<i64: 4, 32>}, {pipeline_mode = #tpu.pipeline_mode<synchronous>, transform_indices = @transform_6, window_bounds = array<i64: 4, 1>}, {transform_indices = @transform_7, window_bounds = array<i64: 4, 1152>}]} {
    %c0 = arith.constant 0 : index
    %c0_0 = arith.constant 0 : index
    %0 = vector.load %arg1[%c0, %c0_0] : memref<16x1152xf32, #tpu.memory_space<vmem>>, vector<16x1152xf32>
    %c0_1 = arith.constant 0 : index
    %c0_2 = arith.constant 0 : index
    %1 = vector.load %arg2[%c0_1, %c0_2] : memref<32x16xf32, #tpu.memory_space<vmem>>, vector<32x16xf32>
    %cst = arith.constant dense<0.000000e+00> : vector<32x1152xf32>
    %2 = tpu.matmul %1, %0, %cst {dimension_numbers = #tpu.dot_dimension_numbers<[1], [0], [0], [1], [0, 0, 1, 1], [], []>} : vector<32x16xf32>, vector<16x1152xf32>, vector<32x1152xf32> -> vector<32x1152xf32>
    %c0_3 = arith.constant 0 : index
    %c0_4 = arith.constant 0 : index
    %3 = vector.load %arg3[%c0_3, %c0_4] : memref<32x1xf32, #tpu.memory_space<vmem>>, vector<32x1xf32>
    %4 = vector.broadcast %3 : vector<32x1xf32> to vector<32x1152xf32>
    %5 = arith.addf %2, %4 : vector<32x1152xf32>
    %cst_5 = arith.constant 0.000000e+00 : f32
    %6 = vector.broadcast %cst_5 : f32 to vector<32x1152xf32>
    %7 = arith.cmpf ogt, %5, %6 : vector<32x1152xf32>
    %cst_6 = arith.constant 0.00999999977 : f32
    %8 = vector.broadcast %cst_6 : f32 to vector<32x1152xf32>
    %9 = arith.mulf %8, %5 : vector<32x1152xf32>
    %10 = arith.select %7, %5, %9 : vector<32x1152xi1>, vector<32x1152xf32>
    %c0_7 = arith.constant 0 : index
    %c0_8 = arith.constant 0 : index
    %11 = vector.load %arg4[%c0_7, %c0_8] : memref<32x32xf32, #tpu.memory_space<vmem>>, vector<32x32xf32>
    %cst_9 = arith.constant dense<0.000000e+00> : vector<32x1152xf32>
    %12 = tpu.matmul %11, %10, %cst_9 {dimension_numbers = #tpu.dot_dimension_numbers<[1], [0], [0], [1], [0, 0, 1, 1], [], []>} : vector<32x32xf32>, vector<32x1152xf32>, vector<32x1152xf32> -> vector<32x1152xf32>
    %c0_10 = arith.constant 0 : index
    %c0_11 = arith.constant 0 : index
    %13 = vector.load %arg5[%c0_10, %c0_11] : memref<32x1xf32, #tpu.memory_space<vmem>>, vector<32x1xf32>
    %14 = vector.broadcast %13 : vector<32x1xf32> to vector<32x1152xf32>
    %15 = arith.addf %12, %14 : vector<32x1152xf32>
    %cst_12 = arith.constant 0.000000e+00 : f32
    %16 = vector.broadcast %cst_12 : f32 to vector<32x1152xf32>
    %17 = arith.cmpf ogt, %15, %16 : vector<32x1152xf32>
    %cst_13 = arith.constant 0.00999999977 : f32
    %18 = vector.broadcast %cst_13 : f32 to vector<32x1152xf32>
    %19 = arith.mulf %18, %15 : vector<32x1152xf32>
    %20 = arith.select %17, %15, %19 : vector<32x1152xi1>, vector<32x1152xf32>
    %c0_14 = arith.constant 0 : index
    %c0_15 = arith.constant 0 : index
    %21 = vector.load %arg6[%c0_14, %c0_15] : memref<4x32xf32, #tpu.memory_space<vmem>>, vector<4x32xf32>
    %cst_16 = arith.constant dense<0.000000e+00> : vector<4x1152xf32>
    %22 = tpu.matmul %21, %20, %cst_16 {dimension_numbers = #tpu.dot_dimension_numbers<[1], [0], [0], [1], [0, 0, 1, 1], [], []>} : vector<4x32xf32>, vector<32x1152xf32>, vector<4x1152xf32> -> vector<4x1152xf32>
    %c0_17 = arith.constant 0 : index
    %c0_18 = arith.constant 0 : index
    %23 = vector.load %arg7[%c0_17, %c0_18] : memref<4x1xf32, #tpu.memory_space<vmem>>, vector<4x1xf32>
    %24 = vector.broadcast %23 : vector<4x1xf32> to vector<4x1152xf32>
    %25 = arith.addf %22, %24 : vector<4x1152xf32>
    %c0_19 = arith.constant 0 : index
    %c0_20 = arith.constant 0 : index
    %26 = vector.load %arg8[%c0_19, %c0_20] : memref<4x1152xf32, #tpu.memory_space<vmem>>, vector<4x1152xf32>
    tpu.vector_store %arg8[%c0_19, %c0_20], %25 {strides = array<i32>} : memref<4x1152xf32, #tpu.memory_space<vmem>>, vector<4x1152xf32>,
    return
  }
  func.func @transform_0(%arg0: i32) -> (i32, i32) {
    %c0_i32 = arith.constant 0 : i32
    %c0_i32_0 = arith.constant 0 : i32
    return %c0_i32, %arg0 : i32, i32
  }
  func.func @transform_1(%arg0: i32) -> (i32, i32) {
    %c0_i32 = arith.constant 0 : i32
    %c0_i32_0 = arith.constant 0 : i32
    %c0_i32_1 = arith.constant 0 : i32
    return %c0_i32, %c0_i32_0 : i32, i32
  }
  func.func @transform_2(%arg0: i32) -> (i32, i32) {
    %c0_i32 = arith.constant 0 : i32
    %c0_i32_0 = arith.constant 0 : i32
    %c0_i32_1 = arith.constant 0 : i32
    return %c0_i32, %c0_i32_0 : i32, i32
  }
  func.func @transform_3(%arg0: i32) -> (i32, i32) {
    %c0_i32 = arith.constant 0 : i32
    %c0_i32_0 = arith.constant 0 : i32
    %c0_i32_1 = arith.constant 0 : i32
    return %c0_i32, %c0_i32_0 : i32, i32
  }
  func.func @transform_4(%arg0: i32) -> (i32, i32) {
    %c0_i32 = arith.constant 0 : i32
    %c0_i32_0 = arith.constant 0 : i32
    %c0_i32_1 = arith.constant 0 : i32
    return %c0_i32, %c0_i32_0 : i32, i32
  }
  func.func @transform_5(%arg0: i32) -> (i32, i32) {
    %c0_i32 = arith.constant 0 : i32
    %c0_i32_0 = arith.constant 0 : i32
    %c0_i32_1 = arith.constant 0 : i32
    return %c0_i32, %c0_i32_0 : i32, i32
  }
  func.func @transform_6(%arg0: i32) -> (i32, i32) {
    %c0_i32 = arith.constant 0 : i32
    %c0_i32_0 = arith.constant 0 : i32
    %c0_i32_1 = arith.constant 0 : i32
    return %c0_i32, %c0_i32_0 : i32, i32
  }
  func.func @transform_7(%arg0: i32) -> (i32, i32) {
    %c0_i32 = arith.constant 0 : i32
    %c0_i32_0 = arith.constant 0 : i32
    return %c0_i32, %arg0 : i32, i32
  }
}

</mosaic_0001>

<llo_original>
// kernel: tpu_custom_call.1
$region0: #{tpu_custom_call.1}
  #allocation0 [shape = 'u32[]', space=smem, size = 0x4, offset = 0x4, fixed_abs, tag = 'smem constant byte address 0x4 - core index']
  #allocation1 [shape = 'u32[144,128]{1,0:T(1,128)}', space=vmem, size = 0x12000, scoped, tag = 'internal scratch']
  %s0 = inlined_call_operand.hbm [shape: f32[16,1152], index: 0, kind: input, shape index: {}]
  %s1 = inlined_call_operand.vmem [shape: f32[32,16], index: 1, kind: input, shape index: {}]
  %s2 = inlined_call_operand.vmem [shape: f32[32,1], index: 2, kind: input, shape index: {}]
  %s3 = inlined_call_operand.vmem [shape: f32[32,32], index: 3, kind: input, shape index: {}]
  %s4 = inlined_call_operand.vmem [shape: f32[32,1], index: 4, kind: input, shape index: {}]
  %s5 = inlined_call_operand.vmem [shape: f32[4,32], index: 5, kind: input, shape index: {}]
  %s6 = inlined_call_operand.vmem [shape: f32[4,1], index: 6, kind: input, shape index: {}]
  %s7 = inlined_call_operand.hbm [shape: f32[4,1152], index: 7, kind: output, shape index: {}]
  %s8 = sld [smem:[#allocation0]]
  $region42: #{tpu_custom_call.1} parent=0
    _
  %s10 = ssub.s32 1, %s8
  %s11 = scalar_select 0, %s10, %s8
  $region1: #{tpu_custom_call.1} parent=0
    #allocation2 [shape = 'u8[73728]{0}', space=vmem, size = 0x12000, scoped, tag = 'input window, operand 0, single buffered']
    #allocation3 [shape = 's32[1]{0}', space=sflag, size = 0x4, scoped, tag = 'scoped memory for tpu_custom_call.1']
    #allocation4 [shape = 's32[1]{0}', space=sflag, size = 0x4, scoped, tag = 'scoped memory for tpu_custom_call.1']
    #allocation5 [shape = 'u8[18432]{0}', space=vmem, size = 0x4800, scoped, tag = 'output window, operand 0, single buffered']
    %12 = vsyncpa [#allocation3], 0
    %13 = vsyncpa [#allocation4], 0
    // Predicated region
    $region2: #{tpu_custom_call.1} parent=1 // pred_check
      _
    $region3: #{tpu_custom_call.1} parent=1 // pred_check_branch
      %15 = sbr.rel (0) target = $region5
    $region4: #{tpu_custom_call.1} parent=1 // pred_region
      %s17 = ssub.s32 2304, 2304
      %18 = vsyncadd [#allocation3], %s17
      %s19 = sshll.u32 [#allocation2], 4
      %s20 = int_to_ptr.vmem [resolvable:$true] %s19
      %25 = dma.hbm_to_vmem [thread:$0]  %s0, 2304, %s20, [#allocation3], 1152, 1152, 72
    $region5: #{tpu_custom_call.1} parent=1 // pred_fallthru
      _
    // Predicated region
    $region6: #{tpu_custom_call.1} parent=1 // pred_check
      _
    $region7: #{tpu_custom_call.1} parent=1 // pred_check_branch
      %27 = sbr.rel (0) target = $region9
    $region8: #{tpu_custom_call.1} parent=1 // pred_region
      _
    $region9: #{tpu_custom_call.1} parent=1 // pred_fallthru
      _
    // Predicated region
    $region10: #{tpu_custom_call.1} parent=1 // pred_check
      _
    $region11: #{tpu_custom_call.1} parent=1 // pred_check_branch
      %29 = sbr.rel (0) target = $region13
    $region12: #{tpu_custom_call.1} parent=1 // pred_region
      _
    $region13: #{tpu_custom_call.1} parent=1 // pred_fallthru
      _
    // Predicated region
    $region14: #{tpu_custom_call.1} parent=1 // pred_check
      _
    $region15: #{tpu_custom_call.1} parent=1 // pred_check_branch
      %31 = sbr.rel (0) target = $region17
    $region16: #{tpu_custom_call.1} parent=1 // pred_region
      _
    $region17: #{tpu_custom_call.1} parent=1 // pred_fallthru
      _
    // Predicated region
    $region18: #{tpu_custom_call.1} parent=1 // pred_check
      _
    $region19: #{tpu_custom_call.1} parent=1 // pred_check_branch
      %33 = sbr.rel (0) target = $region21
    $region20: #{tpu_custom_call.1} parent=1 // pred_region
      _
    $region21: #{tpu_custom_call.1} parent=1 // pred_fallthru
      _
    // Predicated region
    $region22: #{tpu_custom_call.1} parent=1 // pred_check
      _
    $region23: #{tpu_custom_call.1} parent=1 // pred_check_branch
      %35 = sbr.rel (0) target = $region25
    $region24: #{tpu_custom_call.1} parent=1 // pred_region
      _
    $region25: #{tpu_custom_call.1} parent=1 // pred_fallthru
      _
    // Predicated region
    $region26: #{tpu_custom_call.1} parent=1 // pred_check
      _
    $region27: #{tpu_custom_call.1} parent=1 // pred_check_branch
      %37 = sbr.rel (0) target = $region29
    $region28: #{tpu_custom_call.1} parent=1 // pred_region
      _
    $region29: #{tpu_custom_call.1} parent=1 // pred_fallthru
      _
    // Predicated region
    $region30: #{tpu_custom_call.1} parent=1 // pred_check
      _
    $region31: #{tpu_custom_call.1} parent=1 // pred_check_branch
      %39 = sbr.rel (0) target = $region33
    $region32: #{tpu_custom_call.1} parent=1 // pred_region
      %40 = dma.done [#allocation3], 2304
    $region33: #{tpu_custom_call.1} parent=1 // pred_fallthru
      _
    %v41 = vld [vmem:[#allocation2] sm:$0xff]
    %v42 = vld [vmem:[#allocation2 + $0x8] sm:$0xff]
    %v43 = vld [vmem:[#allocation2 + $0x10] sm:$0xff]
    %v44 = vld [vmem:[#allocation2 + $0x18] sm:$0xff]
    %v45 = vld [vmem:[#allocation2 + $0x20] sm:$0xff]
    %v46 = vld [vmem:[#allocation2 + $0x28] sm:$0xff]
    %v47 = vld [vmem:[#allocation2 + $0x30] sm:$0xff]
    %v48 = vld [vmem:[#allocation2 + $0x38] sm:$0xff]
    %v49 = vld [vmem:[#allocation2 + $0x40] sm:$0xff]
    %v50 = vld [vmem:[#allocation2 + $0x48] sm:$0xff]
    %v51 = vld [vmem:[#allocation2 + $0x50] sm:$0xff]
    %v52 = vld [vmem:[#allocation2 + $0x58] sm:$0xff]
    %v53 = vld [vmem:[#allocation2 + $0x60] sm:$0xff]
    %v54 = vld [vmem:[#allocation2 + $0x68] sm:$0xff]
    %v55 = vld [vmem:[#allocation2 + $0x70] sm:$0xff]
    %v56 = vld [vmem:[#allocation2 + $0x78] sm:$0xff]
    %v57 = vld [vmem:[#allocation2 + $0x80] sm:$0xff]
    %v58 = vld [vmem:[#allocation2 + $0x88] sm:$0xff]
    %v59 = vld [vmem:[%s1] sm:$0xff]
    %v60 = vld [vmem:[%s1 + $0x8] sm:$0xff]
    %v61 = vld [vmem:[%s1 + $0x10] sm:$0xff]
    %v62 = vld [vmem:[%s1 + $0x18] sm:$0xff]
    %v63 = vld [vmem:[%s2] sm:$0xff]
    %v64 = vld [vmem:[%s2 + $0x8] sm:$0xff]
    %v65 = vld [vmem:[%s2 + $0x10] sm:$0xff]
    %v66 = vld [vmem:[%s2 + $0x18] sm:$0xff]
    %68 = vset.pattern.permute.xlu0 0
    %69 = vperm.xlu0 %68, %v63
    %v70 = vpop.permute.xlu0 %69
    %73 = vset.pattern.permute.xlu0 0
    %74 = vperm.xlu0 %73, %v64
    %v75 = vpop.permute.xlu0 %74
    %78 = vset.pattern.permute.xlu0 0
    %79 = vperm.xlu0 %78, %v65
    %v80 = vpop.permute.xlu0 %79
    %83 = vset.pattern.permute.xlu0 0
    %84 = vperm.xlu0 %83, %v66
    %v85 = vpop.permute.xlu0 %84
    %vm87 = vcmask 130048
    %v89 = vsel %vm87, %v59, 0
    %v92 = vsel %vm87, %v60, 0
    %v95 = vsel %vm87, %v61, 0
    %v98 = vsel %vm87, %v62, 0
    %100 = vmatprep.subr.mxu0 %v42
    %101 = vmatpush1.msra.mxu0 %v41
    %102 = vmatprep.subr.mxu0 %v51
    %103 = vmatpush1.msra.mxu0 %v50
    %104 = vmatprep.subr.mxu0 0.0
    %105 = vmatpush1.msra.mxu0 0.0
    %106 = vmatprep.subr.mxu0 0.0
    %107 = vmatpush1.msra.mxu0 0.0
    %108 = vmatprep.subr.mxu0 0.0
    %109 = vmatpush1.msra.mxu0 0.0
    %110 = vmatprep.subr.mxu0 0.0
    %111 = vmatpush1.msra.mxu0 0.0
    %112 = vmatprep.subr.mxu0 0.0
    %113 = vmatpush1.msra.mxu0 0.0
    %114 = vmatprep.subr.mxu0 0.0
    %115 = vmatpush1.msra.mxu0 0.0
    %116 = vmatprep.subr.mxu0 0.0
    %117 = vmatpush1.msra.mxu0 0.0
    %118 = vmatprep.subr.mxu0 0.0
    %119 = vmatpush1.msra.mxu0 0.0
    %120 = vmatprep.subr.mxu0 0.0
    %121 = vmatpush1.msra.mxu0 0.0
    %122 = vmatprep.subr.mxu0 0.0
    %123 = vmatpush1.msra.mxu0 0.0
    %124 = vmatprep.subr.mxu0 0.0
    %125 = vmatpush1.msra.mxu0 0.0
    %126 = vmatprep.subr.mxu0 0.0
    %127 = vmatpush1.msra.mxu0 0.0
    %128 = vmatprep.subr.mxu0 0.0
    %129 = vmatpush1.msra.mxu0 0.0
    %130 = vmatprep.subr.mxu0 0.0
    %131 = vmatpush1.msra.mxu0 0.0
    %132 = vmatprep.subr.mxu0 0.0
    %133 = vmatpush1.msra.mxu0 0.0
    %134 = vmatprep.subr.mxu0 0.0
    %135 = vmatpush1.msra.mxu0 0.0
    %136 = vmatprep.subr.mxu0 0.0
    %137 = vmatpush1.msra.mxu0 0.0
    %138 = vmatprep.subr.mxu0 0.0
    %139 = vmatpush1.msra.mxu0 0.0
    %140 = vmatprep.subr.mxu0 0.0
    %141 = vmatpush1.msra.mxu0 0.0
    %142 = vmatprep.subr.mxu0 0.0
    %143 = vmatpush1.msra.mxu0 0.0
    %144 = vmatprep.subr.mxu0 0.0
    %145 = vmatpush1.msra.mxu0 0.0
    %146 = vmatprep.subr.mxu0 0.0
    %147 = vmatpush1.msra.mxu0 0.0
    %148 = vmatprep.subr.mxu0 0.0
    %149 = vmatpush1.msra.mxu0 0.0
    %150 = vmatprep.subr.mxu0 0.0
    %151 = vmatpush1.msra.mxu0 0.0
    %152 = vmatprep.subr.mxu0 0.0
    %153 = vmatpush1.msra.mxu0 0.0
    %154 = vmatprep.subr.mxu0 0.0
    %155 = vmatpush1.msra.mxu0 0.0
    %156 = vmatprep.subr.mxu0 0.0
    %157 = vmatpush1.msra.mxu0 0.0
    %158 = vmatprep.subr.mxu0 0.0
    %159 = vmatpush1.msra.mxu0 0.0
    %160 = vmatprep.subr.mxu0 0.0
    %161 = vmatpush1.msra.mxu0 0.0
    %162 = vmatprep.subr.mxu0 0.0
    %163 = vmatpush1.msra.mxu0 0.0
    %164 = vmatprep.mubr.f32.mxu0 0.0
    %165 = vmatmul.mubr.f32.gmra.mrb[0].mxu0 %v89
    %v166 = vpop.f32.mrb[0].mxu0
    %v167 = vadd.f32 %v70, %v166
    %v168 = vpop.f32.mrb[0].mxu0
    %v169 = vadd.f32 %v70, %v168
    %170 = vmatprep.mubr.f32.mxu0 0.0
    %171 = vmatmul.mubr.f32.gmra.mrb[0].mxu0 %v92
    %v172 = vpop.f32.mrb[0].mxu0
    %v173 = vadd.f32 %v75, %v172
    %v174 = vpop.f32.mrb[0].mxu0
    %v175 = vadd.f32 %v75, %v174
    %176 = vmatprep.mubr.f32.mxu0 0.0
    %177 = vmatmul.mubr.f32.gmra.mrb[0].mxu0 %v95
    %v178 = vpop.f32.mrb[0].mxu0
    %v179 = vadd.f32 %v80, %v178
    %v180 = vpop.f32.mrb[0].mxu0
    %v181 = vadd.f32 %v80, %v180
    %182 = vmatprep.mubr.f32.mxu0 0.0
    %183 = vmatmul.mubr.f32.gmra.mrb[0].mxu0 %v98
    %v184 = vpop.f32.mrb[0].mxu0
    %v185 = vadd.f32 %v85, %v184
    %v186 = vpop.f32.mrb[0].mxu0
    %v187 = vadd.f32 %v85, %v186
    %188 = vdwg.mxu0
    %189 = vmatprep.subr.mxu0 %v44
    %190 = vmatpush1.msra.mxu0 %v43
    %191 = vmatprep.subr.mxu0 %v53
    %192 = vmatpush1.msra.mxu0 %v52
    %193 = vmatprep.subr.mxu0 0.0
    %194 = vmatpush1.msra.mxu0 0.0
    %195 = vmatprep.subr.mxu0 0.0
    %196 = vmatpush1.msra.mxu0 0.0
    %197 = vmatprep.subr.mxu0 0.0
    %198 = vmatpush1.msra.mxu0 0.0
    %199 = vmatprep.subr.mxu0 0.0
    %200 = vmatpush1.msra.mxu0 0.0
    %201 = vmatprep.subr.mxu0 0.0
    %202 = vmatpush1.msra.mxu0 0.0
    %203 = vmatprep.subr.mxu0 0.0
    %204 = vmatpush1.msra.mxu0 0.0
    %205 = vmatprep.subr.mxu0 0.0
    %206 = vmatpush1.msra.mxu0 0.0
    %207 = vmatprep.subr.mxu0 0.0
    %208 = vmatpush1.msra.mxu0 0.0
    %209 = vmatprep.subr.mxu0 0.0
    %210 = vmatpush1.msra.mxu0 0.0
    %211 = vmatprep.subr.mxu0 0.0
    %212 = vmatpush1.msra.mxu0 0.0
    %213 = vmatprep.subr.mxu0 0.0
    %214 = vmatpush1.msra.mxu0 0.0
    %215 = vmatprep.subr.mxu0 0.0
    %216 = vmatpush1.msra.mxu0 0.0
    %217 = vmatprep.subr.mxu0 0.0
    %218 = vmatpush1.msra.mxu0 0.0
    %219 = vmatprep.subr.mxu0 0.0
    %220 = vmatpush1.msra.mxu0 0.0
    %221 = vmatprep.subr.mxu0 0.0
    %222 = vmatpush1.msra.mxu0 0.0
    %223 = vmatprep.subr.mxu0 0.0
    %224 = vmatpush1.msra.mxu0 0.0
    %225 = vmatprep.subr.mxu0 0.0
    %226 = vmatpush1.msra.mxu0 0.0
    %227 = vmatprep.subr.mxu0 0.0
    %228 = vmatpush1.msra.mxu0 0.0
    %229 = vmatprep.subr.mxu0 0.0
    %230 = vmatpush1.msra.mxu0 0.0
    %231 = vmatprep.subr.mxu0 0.0
    %232 = vmatpush1.msra.mxu0 0.0
    %233 = vmatprep.subr.mxu0 0.0
    %234 = vmatpush1.msra.mxu0 0.0
    %235 = vmatprep.subr.mxu0 0.0
    %236 = vmatpush1.msra.mxu0 0.0
    %237 = vmatprep.subr.mxu0 0.0
    %238 = vmatpush1.msra.mxu0 0.0
    %239 = vmatprep.subr.mxu0 0.0
    %240 = vmatpush1.msra.mxu0 0.0
    %241 = vmatprep.subr.mxu0 0.0
    %242 = vmatpush1.msra.mxu0 0.0
    %243 = vmatprep.subr.mxu0 0.0
    %244 = vmatpush1.msra.mxu0 0.0
    %245 = vmatprep.subr.mxu0 0.0
    %246 = vmatpush1.msra.mxu0 0.0
    %247 = vmatprep.subr.mxu0 0.0
    %248 = vmatpush1.msra.mxu0 0.0
    %249 = vmatprep.subr.mxu0 0.0
    %250 = vmatpush1.msra.mxu0 0.0
    %251 = vmatprep.subr.mxu0 0.0
    %252 = vmatpush1.msra.mxu0 0.0
    %253 = vmatprep.mubr.f32.mxu0 0.0
    %254 = vmatmul.mubr.f32.gmra.mrb[0].mxu0 %v89
    %v255 = vpop.f32.mrb[0].mxu0
    %v256 = vadd.f32 %v70, %v255
    %v257 = vpop.f32.mrb[0].mxu0
    %v258 = vadd.f32 %v70, %v257
    %259 = vmatprep.mubr.f32.mxu0 0.0
    %260 = vmatmul.mubr.f32.gmra.mrb[0].mxu0 %v92
    %v261 = vpop.f32.mrb[0].mxu0
    %v262 = vadd.f32 %v75, %v261
    %v263 = vpop.f32.mrb[0].mxu0
    %v264 = vadd.f32 %v75, %v263
    %265 = vmatprep.mubr.f32.mxu0 0.0
    %266 = vmatmul.mubr.f32.gmra.mrb[0].mxu0 %v95
    %v267 = vpop.f32.mrb[0].mxu0
    %v268 = vadd.f32 %v80, %v267
    %v269 = vpop.f32.mrb[0].mxu0
    %v270 = vadd.f32 %v80, %v269
    %271 = vmatprep.mubr.f32.mxu0 0.0
    %272 = vmatmul.mubr.f32.gmra.mrb[0].mxu0 %v98
    %v273 = vpop.f32.mrb[0].mxu0
    %v274 = vadd.f32 %v85, %v273
    %v275 = vpop.f32.mrb[0].mxu0
    %v276 = vadd.f32 %v85, %v275
    %277 = vdwg.mxu0
    %278 = vmatprep.subr.mxu0 %v46
    %279 = vmatpush1.msra.mxu0 %v45
    %280 = vmatprep.subr.mxu0 %v55
    %281 = vmatpush1.msra.mxu0 %v54
    %282 = vmatprep.subr.mxu0 0.0
    %283 = vmatpush1.msra.mxu0 0.0
    %284 = vmatprep.subr.mxu0 0.0
    %285 = vmatpush1.msra.mxu0 0.0
    %286 = vmatprep.subr.mxu0 0.0
    %287 = vmatpush1.msra.mxu0 0.0
    %288 = vmatprep.subr.mxu0 0.0
    %289 = vmatpush1.msra.mxu0 0.0
    %290 = vmatprep.subr.mxu0 0.0
    %291 = vmatpush1.msra.mxu0 0.0
    %292 = vmatprep.subr.mxu0 0.0
    %293 = vmatpush1.msra.mxu0 0.0
    %294 = vmatprep.subr.mxu0 0.0
    %295 = vmatpush1.msra.mxu0 0.0
    %296 = vmatprep.subr.mxu0 0.0
    %297 = vmatpush1.msra.mxu0 0.0
    %298 = vmatprep.subr.mxu0 0.0
    %299 = vmatpush1.msra.mxu0 0.0
    %300 = vmatprep.subr.mxu0 0.0
    %301 = vmatpush1.msra.mxu0 0.0
    %302 = vmatprep.subr.mxu0 0.0
    %303 = vmatpush1.msra.mxu0 0.0
    %304 = vmatprep.subr.mxu0 0.0
    %305 = vmatpush1.msra.mxu0 0.0
    %306 = vmatprep.subr.mxu0 0.0
    %307 = vmatpush1.msra.mxu0 0.0
    %308 = vmatprep.subr.mxu0 0.0
    %309 = vmatpush1.msra.mxu0 0.0
    %310 = vmatprep.subr.mxu0 0.0
    %311 = vmatpush1.msra.mxu0 0.0
    %312 = vmatprep.subr.mxu0 0.0
    %313 = vmatpush1.msra.mxu0 0.0
    %314 = vmatprep.subr.mxu0 0.0
    %315 = vmatpush1.msra.mxu0 0.0
    %316 = vmatprep.subr.mxu0 0.0
    %317 = vmatpush1.msra.mxu0 0.0
    %318 = vmatprep.subr.mxu0 0.0
    %319 = vmatpush1.msra.mxu0 0.0
    %320 = vmatprep.subr.mxu0 0.0
    %321 = vmatpush1.msra.mxu0 0.0
    %322 = vmatprep.subr.mxu0 0.0
    %323 = vmatpush1.msra.mxu0 0.0
    %324 = vmatprep.subr.mxu0 0.0
    %325 = vmatpush1.msra.mxu0 0.0
    %326 = vmatprep.subr.mxu0 0.0
    %327 = vmatpush1.msra.mxu0 0.0
    %328 = vmatprep.subr.mxu0 0.0
    %329 = vmatpush1.msra.mxu0 0.0
    %330 = vmatprep.subr.mxu0 0.0
    %331 = vmatpush1.msra.mxu0 0.0
    %332 = vmatprep.subr.mxu0 0.0
    %333 = vmatpush1.msra.mxu0 0.0
    %334 = vmatprep.subr.mxu0 0.0
    %335 = vmatpush1.msra.mxu0 0.0
    %336 = vmatprep.subr.mxu0 0.0
    %337 = vmatpush1.msra.mxu0 0.0
    %338 = vmatprep.subr.mxu0 0.0
    %339 = vmatpush1.msra.mxu0 0.0
    %340 = vmatprep.subr.mxu0 0.0
    %341 = vmatpush1.msra.mxu0 0.0
    %342 = vmatprep.mubr.f32.mxu0 0.0
    %343 = vmatmul.mubr.f32.gmra.mrb[0].mxu0 %v89
    %v344 = vpop.f32.mrb[0].mxu0
    %v345 = vadd.f32 %v70, %v344
    %v346 = vpop.f32.mrb[0].mxu0
    %v347 = vadd.f32 %v70, %v346
    %348 = vmatprep.mubr.f32.mxu0 0.0
    %349 = vmatmul.mubr.f32.gmra.mrb[0].mxu0 %v92
    %v350 = vpop.f32.mrb[0].mxu0
    %v351 = vadd.f32 %v75, %v350
    %v352 = vpop.f32.mrb[0].mxu0
    %v353 = vadd.f32 %v75, %v352
    %354 = vmatprep.mubr.f32.mxu0 0.0
    %355 = vmatmul.mubr.f32.gmra.mrb[0].mxu0 %v95
    %v356 = vpop.f32.mrb[0].mxu0
    %v357 = vadd.f32 %v80, %v356
    %v358 = vpop.f32.mrb[0].mxu0
    %v359 = vadd.f32 %v80, %v358
    %360 = vmatprep.mubr.f32.mxu0 0.0
    %361 = vmatmul.mubr.f32.gmra.mrb[0].mxu0 %v98
    %v362 = vpop.f32.mrb[0].mxu0
    %v363 = vadd.f32 %v85, %v362
    %v364 = vpop.f32.mrb[0].mxu0
    %v365 = vadd.f32 %v85, %v364
    %366 = vdwg.mxu0
    %367 = vmatprep.subr.mxu0 %v48
    %368 = vmatpush1.msra.mxu0 %v47
    %369 = vmatprep.subr.mxu0 %v57
    %370 = vmatpush1.msra.mxu0 %v56
    %371 = vmatprep.subr.mxu0 0.0
    %372 = vmatpush1.msra.mxu0 0.0
    %373 = vmatprep.subr.mxu0 0.0
    %374 = vmatpush1.msra.mxu0 0.0
    %375 = vmatprep.subr.mxu0 0.0
    %376 = vmatpush1.msra.mxu0 0.0
    %377 = vmatprep.subr.mxu0 0.0
    %378 = vmatpush1.msra.mxu0 0.0
    %379 = vmatprep.subr.mxu0 0.0
    %380 = vmatpush1.msra.mxu0 0.0
    %381 = vmatprep.subr.mxu0 0.0
    %382 = vmatpush1.msra.mxu0 0.0
    %383 = vmatprep.subr.mxu0 0.0
    %384 = vmatpush1.msra.mxu0 0.0
    %385 = vmatprep.subr.mxu0 0.0
    %386 = vmatpush1.msra.mxu0 0.0
    %387 = vmatprep.subr.mxu0 0.0
    %388 = vmatpush1.msra.mxu0 0.0
    %389 = vmatprep.subr.mxu0 0.0
    %390 = vmatpush1.msra.mxu0 0.0
    %391 = vmatprep.subr.mxu0 0.0
    %392 = vmatpush1.msra.mxu0 0.0
    %393 = vmatprep.subr.mxu0 0.0
    %394 = vmatpush1.msra.mxu0 0.0
    %395 = vmatprep.subr.mxu0 0.0
    %396 = vmatpush1.msra.mxu0 0.0
    %397 = vmatprep.subr.mxu0 0.0
    %398 = vmatpush1.msra.mxu0 0.0
    %399 = vmatprep.subr.mxu0 0.0
    %400 = vmatpush1.msra.mxu0 0.0
    %401 = vmatprep.subr.mxu0 0.0
    %402 = vmatpush1.msra.mxu0 0.0
    %403 = vmatprep.subr.mxu0 0.0
    %404 = vmatpush1.msra.mxu0 0.0
    %405 = vmatprep.subr.mxu0 0.0
    %406 = vmatpush1.msra.mxu0 0.0
    %407 = vmatprep.subr.mxu0 0.0
    %408 = vmatpush1.msra.mxu0 0.0
    %409 = vmatprep.subr.mxu0 0.0
    %410 = vmatpush1.msra.mxu0 0.0
    %411 = vmatprep.subr.mxu0 0.0
    %412 = vmatpush1.msra.mxu0 0.0
    %413 = vmatprep.subr.mxu0 0.0
    %414 = vmatpush1.msra.mxu0 0.0
    %415 = vmatprep.subr.mxu0 0.0
    %416 = vmatpush1.msra.mxu0 0.0
    %417 = vmatprep.subr.mxu0 0.0
    %418 = vmatpush1.msra.mxu0 0.0
    %419 = vmatprep.subr.mxu0 0.0
    %420 = vmatpush1.msra.mxu0 0.0
    %421 = vmatprep.subr.mxu0 0.0
    %422 = vmatpush1.msra.mxu0 0.0
    %423 = vmatprep.subr.mxu0 0.0
    %424 = vmatpush1.msra.mxu0 0.0
    %425 = vmatprep.subr.mxu0 0.0
    %426 = vmatpush1.msra.mxu0 0.0
    %427 = vmatprep.subr.mxu0 0.0
    %428 = vmatpush1.msra.mxu0 0.0
    %429 = vmatprep.subr.mxu0 0.0
    %430 = vmatpush1.msra.mxu0 0.0
    %431 = vmatprep.mubr.f32.mxu0 0.0
    %432 = vmatmul.mubr.f32.gmra.mrb[0].mxu0 %v89
    %v433 = vpop.f32.mrb[0].mxu0
    %v434 = vadd.f32 %v70, %v433
    %v435 = vpop.f32.mrb[0].mxu0
    %v436 = vadd.f32 %v70, %v435
    %437 = vmatprep.mubr.f32.mxu0 0.0
    %438 = vmatmul.mubr.f32.gmra.mrb[0].mxu0 %v92
    %v439 = vpop.f32.mrb[0].mxu0
    %v440 = vadd.f32 %v75, %v439
    %v441 = vpop.f32.mrb[0].mxu0
    %v442 = vadd.f32 %v75, %v441
    %443 = vmatprep.mubr.f32.mxu0 0.0
    %444 = vmatmul.mubr.f32.gmra.mrb[0].mxu0 %v95
    %v445 = vpop.f32.mrb[0].mxu0
    %v446 = vadd.f32 %v80, %v445
    %v447 = vpop.f32.mrb[0].mxu0
    %v448 = vadd.f32 %v80, %v447
    %449 = vmatprep.mubr.f32.mxu0 0.0
    %450 = vmatmul.mubr.f32.gmra.mrb[0].mxu0 %v98
    %v451 = vpop.f32.mrb[0].mxu0
    %v452 = vadd.f32 %v85, %v451
    %v453 = vpop.f32.mrb[0].mxu0
    %v454 = vadd.f32 %v85, %v453
    %455 = vdwg.mxu0
    %456 = vmatprep.subr.mxu0 0.0
    %457 = vmatpush1.msra.mxu0 %v49
    %458 = vmatprep.subr.mxu0 0.0
    %459 = vmatpush1.msra.mxu0 %v58
    %460 = vmatprep.subr.mxu0 0.0
    %461 = vmatpush1.msra.mxu0 0.0
    %462 = vmatprep.subr.mxu0 0.0
    %463 = vmatpush1.msra.mxu0 0.0
    %464 = vmatprep.subr.mxu0 0.0
    %465 = vmatpush1.msra.mxu0 0.0
    %466 = vmatprep.subr.mxu0 0.0
    %467 = vmatpush1.msra.mxu0 0.0
    %468 = vmatprep.subr.mxu0 0.0
    %469 = vmatpush1.msra.mxu0 0.0
    %470 = vmatprep.subr.mxu0 0.0
    %471 = vmatpush1.msra.mxu0 0.0
    %472 = vmatprep.subr.mxu0 0.0
    %473 = vmatpush1.msra.mxu0 0.0
    %474 = vmatprep.subr.mxu0 0.0
    %475 = vmatpush1.msra.mxu0 0.0
    %476 = vmatprep.subr.mxu0 0.0
    %477 = vmatpush1.msra.mxu0 0.0
    %478 = vmatprep.subr.mxu0 0.0
    %479 = vmatpush1.msra.mxu0 0.0
    %480 = vmatprep.subr.mxu0 0.0
    %481 = vmatpush1.msra.mxu0 0.0
    %482 = vmatprep.subr.mxu0 0.0
    %483 = vmatpush1.msra.mxu0 0.0
    %484 = vmatprep.subr.mxu0 0.0
    %485 = vmatpush1.msra.mxu0 0.0
    %486 = vmatprep.subr.mxu0 0.0
    %487 = vmatpush1.msra.mxu0 0.0
    %488 = vmatprep.subr.mxu0 0.0
    %489 = vmatpush1.msra.mxu0 0.0
    %490 = vmatprep.subr.mxu0 0.0
    %491 = vmatpush1.msra.mxu0 0.0
    %492 = vmatprep.subr.mxu0 0.0
    %493 = vmatpush1.msra.mxu0 0.0
    %494 = vmatprep.subr.mxu0 0.0
    %495 = vmatpush1.msra.mxu0 0.0
    %496 = vmatprep.subr.mxu0 0.0
    %497 = vmatpush1.msra.mxu0 0.0
    %498 = vmatprep.subr.mxu0 0.0
    %499 = vmatpush1.msra.mxu0 0.0
    %500 = vmatprep.subr.mxu0 0.0
    %501 = vmatpush1.msra.mxu0 0.0
    %502 = vmatprep.subr.mxu0 0.0
    %503 = vmatpush1.msra.mxu0 0.0
    %504 = vmatprep.subr.mxu0 0.0
    %505 = vmatpush1.msra.mxu0 0.0
    %506 = vmatprep.subr.mxu0 0.0
    %507 = vmatpush1.msra.mxu0 0.0
    %508 = vmatprep.subr.mxu0 0.0
    %509 = vmatpush1.msra.mxu0 0.0
    %510 = vmatprep.subr.mxu0 0.0
    %511 = vmatpush1.msra.mxu0 0.0
    %512 = vmatprep.subr.mxu0 0.0
    %513 = vmatpush1.msra.mxu0 0.0
    %514 = vmatprep.subr.mxu0 0.0
    %515 = vmatpush1.msra.mxu0 0.0
    %516 = vmatprep.subr.mxu0 0.0
    %517 = vmatpush1.msra.mxu0 0.0
    %518 = vmatprep.subr.mxu0 0.0
    %519 = vmatpush1.msra.mxu0 0.0
    %520 = vmatprep.mubr.f32.mxu0 0.0
    %521 = vmatmul.mubr.f32.gmra.mrb[0].mxu0 %v89
    %v522 = vpop.f32.mrb[0].mxu0
    %v523 = vadd.f32 %v70, %v522
    %v524 = vpop.f32.mrb[0].mxu0
    %525 = vmatprep.mubr.f32.mxu0 0.0
    %526 = vmatmul.mubr.f32.gmra.mrb[0].mxu0 %v92
    %v527 = vpop.f32.mrb[0].mxu0
    %v528 = vadd.f32 %v75, %v527
    %v529 = vpop.f32.mrb[0].mxu0
    %530 = vmatprep.mubr.f32.mxu0 0.0
    %531 = vmatmul.mubr.f32.gmra.mrb[0].mxu0 %v95
    %v532 = vpop.f32.mrb[0].mxu0
    %v533 = vadd.f32 %v80, %v532
    %v534 = vpop.f32.mrb[0].mxu0
    %535 = vmatprep.mubr.f32.mxu0 0.0
    %536 = vmatmul.mubr.f32.gmra.mrb[0].mxu0 %v98
    %v537 = vpop.f32.mrb[0].mxu0
    %v538 = vadd.f32 %v85, %v537
    %v539 = vpop.f32.mrb[0].mxu0
    %540 = vdwg.mxu0
    %vm541 = vcmp.gt.f32.partialorder %v167, 0.0
    %vm542 = vcmp.gt.f32.partialorder %v169, 0.0
    %vm543 = vcmp.gt.f32.partialorder %v256, 0.0
    %vm544 = vcmp.gt.f32.partialorder %v258, 0.0
    %vm545 = vcmp.gt.f32.partialorder %v345, 0.0
    %vm546 = vcmp.gt.f32.partialorder %v347, 0.0
    %vm547 = vcmp.gt.f32.partialorder %v434, 0.0
    %vm548 = vcmp.gt.f32.partialorder %v436, 0.0
    %vm549 = vcmp.gt.f32.partialorder %v523, 0.0
    %vm550 = vcmp.gt.f32.partialorder %v173, 0.0
    %vm551 = vcmp.gt.f32.partialorder %v175, 0.0
    %vm552 = vcmp.gt.f32.partialorder %v262, 0.0
    %vm553 = vcmp.gt.f32.partialorder %v264, 0.0
    %vm554 = vcmp.gt.f32.partialorder %v351, 0.0
    %vm555 = vcmp.gt.f32.partialorder %v353, 0.0
    %vm556 = vcmp.gt.f32.partialorder %v440, 0.0
    %vm557 = vcmp.gt.f32.partialorder %v442, 0.0
    %vm558 = vcmp.gt.f32.partialorder %v528, 0.0
    %vm559 = vcmp.gt.f32.partialorder %v179, 0.0
    %vm560 = vcmp.gt.f32.partialorder %v181, 0.0
    %vm561 = vcmp.gt.f32.partialorder %v268, 0.0
    %vm562 = vcmp.gt.f32.partialorder %v270, 0.0
    %vm563 = vcmp.gt.f32.partialorder %v357, 0.0
    %vm564 = vcmp.gt.f32.partialorder %v359, 0.0
    %vm565 = vcmp.gt.f32.partialorder %v446, 0.0
    %vm566 = vcmp.gt.f32.partialorder %v448, 0.0
    %vm567 = vcmp.gt.f32.partialorder %v533, 0.0
    %vm568 = vcmp.gt.f32.partialorder %v185, 0.0
    %vm569 = vcmp.gt.f32.partialorder %v187, 0.0
    %vm570 = vcmp.gt.f32.partialorder %v274, 0.0
    %vm571 = vcmp.gt.f32.partialorder %v276, 0.0
    %vm572 = vcmp.gt.f32.partialorder %v363, 0.0
    %vm573 = vcmp.gt.f32.partialorder %v365, 0.0
    %vm574 = vcmp.gt.f32.partialorder %v452, 0.0
    %vm575 = vcmp.gt.f32.partialorder %v454, 0.0
    %vm576 = vcmp.gt.f32.partialorder %v538, 0.0
    %v577 = vmul.f32 %v167, 0.01
    %v578 = vmul.f32 %v169, 0.01
    %v579 = vmul.f32 %v256, 0.01
    %v580 = vmul.f32 %v258, 0.01
    %v581 = vmul.f32 %v345, 0.01
    %v582 = vmul.f32 %v347, 0.01
    %v583 = vmul.f32 %v434, 0.01
    %v584 = vmul.f32 %v436, 0.01
    %v585 = vmul.f32 %v523, 0.01
    %v586 = vmul.f32 %v173, 0.01
    %v587 = vmul.f32 %v175, 0.01
    %v588 = vmul.f32 %v262, 0.01
    %v589 = vmul.f32 %v264, 0.01
    %v590 = vmul.f32 %v351, 0.01
    %v591 = vmul.f32 %v353, 0.01
    %v592 = vmul.f32 %v440, 0.01
    %v593 = vmul.f32 %v442, 0.01
    %v594 = vmul.f32 %v528, 0.01
    %v595 = vmul.f32 %v179, 0.01
    %v596 = vmul.f32 %v181, 0.01
    %v597 = vmul.f32 %v268, 0.01
    %v598 = vmul.f32 %v270, 0.01
    %v599 = vmul.f32 %v357, 0.01
    %v600 = vmul.f32 %v359, 0.01
    %v601 = vmul.f32 %v446, 0.01
    %v602 = vmul.f32 %v448, 0.01
    %v603 = vmul.f32 %v533, 0.01
    %v604 = vmul.f32 %v185, 0.01
    %v605 = vmul.f32 %v187, 0.01
    %v606 = vmul.f32 %v274, 0.01
    %v607 = vmul.f32 %v276, 0.01
    %v608 = vmul.f32 %v363, 0.01
    %v609 = vmul.f32 %v365, 0.01
    %v610 = vmul.f32 %v452, 0.01
    %v611 = vmul.f32 %v454, 0.01
    %v612 = vmul.f32 %v538, 0.01
    %v613 = vsel %vm541, %v167, %v577
    %v614 = vsel %vm542, %v169, %v578
    %v615 = vsel %vm543, %v256, %v579
    %v616 = vsel %vm544, %v258, %v580
    %v617 = vsel %vm545, %v345, %v581
    %v618 = vsel %vm546, %v347, %v582
    %v619 = vsel %vm547, %v434, %v583
    %v620 = vsel %vm548, %v436, %v584
    %v621 = vsel %vm549, %v523, %v585
    %v622 = vsel %vm550, %v173, %v586
    %v623 = vsel %vm551, %v175, %v587
    %v624 = vsel %vm552, %v262, %v588
    %v625 = vsel %vm553, %v264, %v589
    %v626 = vsel %vm554, %v351, %v590
    %v627 = vsel %vm555, %v353, %v591
    %v628 = vsel %vm556, %v440, %v592
    %v629 = vsel %vm557, %v442, %v593
    %v630 = vsel %vm558, %v528, %v594
    %v631 = vsel %vm559, %v179, %v595
    %v632 = vsel %vm560, %v181, %v596
    %v633 = vsel %vm561, %v268, %v597
    %v634 = vsel %vm562, %v270, %v598
    %v635 = vsel %vm563, %v357, %v599
    %v636 = vsel %vm564, %v359, %v600
    %v637 = vsel %vm565, %v446, %v601
    %v638 = vsel %vm566, %v448, %v602
    %v639 = vsel %vm567, %v533, %v603
    %v640 = vsel %vm568, %v185, %v604
    %v641 = vsel %vm569, %v187, %v605
    %v642 = vsel %vm570, %v274, %v606
    %v643 = vsel %vm571, %v276, %v607
    %v644 = vsel %vm572, %v363, %v608
    %v645 = vsel %vm573, %v365, %v609
    %v646 = vsel %vm574, %v452, %v610
    %v647 = vsel %vm575, %v454, %v611
    %v648 = vsel %vm576, %v538, %v612
    %v649 = vld [vmem:[%s3] sm:$0xff]
    %v650 = vld [vmem:[%s3 + $0x8] sm:$0xff]
    %v651 = vld [vmem:[%s3 + $0x10] sm:$0xff]
    %v652 = vld [vmem:[%s3 + $0x18] sm:$0xff]
    %v653 = vld [vmem:[%s4] sm:$0xff]
    %v654 = vld [vmem:[%s4 + $0x8] sm:$0xff]
    %v655 = vld [vmem:[%s4 + $0x10] sm:$0xff]
    %v656 = vld [vmem:[%s4 + $0x18] sm:$0xff]
    %658 = vset.pattern.permute.xlu0 0
    %659 = vperm.xlu0 %658, %v653
    %v660 = vpop.permute.xlu0 %659
    %663 = vset.pattern.permute.xlu0 0
    %664 = vperm.xlu0 %663, %v654
    %v665 = vpop.permute.xlu0 %664
    %668 = vset.pattern.permute.xlu0 0
    %669 = vperm.xlu0 %668, %v655
    %v670 = vpop.permute.xlu0 %669
    %673 = vset.pattern.permute.xlu0 0
    %674 = vperm.xlu0 %673, %v656
    %v675 = vpop.permute.xlu0 %674
    %vm677 = vcmask 261120
    %v679 = vsel %vm677, %v649, 0
    %v682 = vsel %vm677, %v650, 0
    %v685 = vsel %vm677, %v651, 0
    %v688 = vsel %vm677, %v652, 0
    %690 = vmatprep.subr.mxu0 %v614
    %691 = vmatpush1.msra.mxu0 %v613
    %692 = vmatprep.subr.mxu0 %v623
    %693 = vmatpush1.msra.mxu0 %v622
    %694 = vmatprep.subr.mxu0 %v632
    %695 = vmatpush1.msra.mxu0 %v631
    %696 = vmatprep.subr.mxu0 %v641
    %697 = vmatpush1.msra.mxu0 %v640
    %698 = vmatprep.subr.mxu0 0.0
    %699 = vmatpush1.msra.mxu0 0.0
    %700 = vmatprep.subr.mxu0 0.0
    %701 = vmatpush1.msra.mxu0 0.0
    %702 = vmatprep.subr.mxu0 0.0
    %703 = vmatpush1.msra.mxu0 0.0
    %704 = vmatprep.subr.mxu0 0.0
    %705 = vmatpush1.msra.mxu0 0.0
    %706 = vmatprep.subr.mxu0 0.0
    %707 = vmatpush1.msra.mxu0 0.0
    %708 = vmatprep.subr.mxu0 0.0
    %709 = vmatpush1.msra.mxu0 0.0
    %710 = vmatprep.subr.mxu0 0.0
    %711 = vmatpush1.msra.mxu0 0.0
    %712 = vmatprep.subr.mxu0 0.0
    %713 = vmatpush1.msra.mxu0 0.0
    %714 = vmatprep.subr.mxu0 0.0
    %715 = vmatpush1.msra.mxu0 0.0
    %716 = vmatprep.subr.mxu0 0.0
    %717 = vmatpush1.msra.mxu0 0.0
    %718 = vmatprep.subr.mxu0 0.0
    %719 = vmatpush1.msra.mxu0 0.0
    %720 = vmatprep.subr.mxu0 0.0
    %721 = vmatpush1.msra.mxu0 0.0
    %722 = vmatprep.subr.mxu0 0.0
    %723 = vmatpush1.msra.mxu0 0.0
    %724 = vmatprep.subr.mxu0 0.0
    %725 = vmatpush1.msra.mxu0 0.0
    %726 = vmatprep.subr.mxu0 0.0
    %727 = vmatpush1.msra.mxu0 0.0
    %728 = vmatprep.subr.mxu0 0.0
    %729 = vmatpush1.msra.mxu0 0.0
    %730 = vmatprep.subr.mxu0 0.0
    %731 = vmatpush1.msra.mxu0 0.0
    %732 = vmatprep.subr.mxu0 0.0
    %733 = vmatpush1.msra.mxu0 0.0
    %734 = vmatprep.subr.mxu0 0.0
    %735 = vmatpush1.msra.mxu0 0.0
    %736 = vmatprep.subr.mxu0 0.0
    %737 = vmatpush1.msra.mxu0 0.0
    %738 = vmatprep.subr.mxu0 0.0
    %739 = vmatpush1.msra.mxu0 0.0
    %740 = vmatprep.subr.mxu0 0.0
    %741 = vmatpush1.msra.mxu0 0.0
    %742 = vmatprep.subr.mxu0 0.0
    %743 = vmatpush1.msra.mxu0 0.0
    %744 = vmatprep.subr.mxu0 0.0
    %745 = vmatpush1.msra.mxu0 0.0
    %746 = vmatprep.subr.mxu0 0.0
    %747 = vmatpush1.msra.mxu0 0.0
    %748 = vmatprep.subr.mxu0 0.0
    %749 = vmatpush1.msra.mxu0 0.0
    %750 = vmatprep.subr.mxu0 0.0
    %751 = vmatpush1.msra.mxu0 0.0
    %752 = vmatprep.subr.mxu0 0.0
    %753 = vmatpush1.msra.mxu0 0.0
    %754 = vmatprep.mubr.f32.mxu0 0.0
    %755 = vmatmul.mubr.f32.gmra.mrb[0].mxu0 %v679
    %v756 = vpop.f32.mrb[0].mxu0
    %v757 = vadd.f32 %v660, %v756
    %v758 = vpop.f32.mrb[0].mxu0
    %v759 = vadd.f32 %v660, %v758
    %760 = vmatprep.mubr.f32.mxu0 0.0
    %761 = vmatmul.mubr.f32.gmra.mrb[0].mxu0 %v682
    %v762 = vpop.f32.mrb[0].mxu0
    %v763 = vadd.f32 %v665, %v762
    %v764 = vpop.f32.mrb[0].mxu0
    %v765 = vadd.f32 %v665, %v764
    %766 = vmatprep.mubr.f32.mxu0 0.0
    %767 = vmatmul.mubr.f32.gmra.mrb[0].mxu0 %v685
    %v768 = vpop.f32.mrb[0].mxu0
    %v769 = vadd.f32 %v670, %v768
    %v770 = vpop.f32.mrb[0].mxu0
    %v771 = vadd.f32 %v670, %v770
    %772 = vmatprep.mubr.f32.mxu0 0.0
    %773 = vmatmul.mubr.f32.gmra.mrb[0].mxu0 %v688
    %v774 = vpop.f32.mrb[0].mxu0
    %v775 = vadd.f32 %v675, %v774
    %v776 = vpop.f32.mrb[0].mxu0
    %v777 = vadd.f32 %v675, %v776
    %778 = vdwg.mxu0
    %779 = vmatprep.subr.mxu0 %v616
    %780 = vmatpush1.msra.mxu0 %v615
    %781 = vmatprep.subr.mxu0 %v625
    %782 = vmatpush1.msra.mxu0 %v624
    %783 = vmatprep.subr.mxu0 %v634
    %784 = vmatpush1.msra.mxu0 %v633
    %785 = vmatprep.subr.mxu0 %v643
    %786 = vmatpush1.msra.mxu0 %v642
    %787 = vmatprep.subr.mxu0 0.0
    %788 = vmatpush1.msra.mxu0 0.0
    %789 = vmatprep.subr.mxu0 0.0
    %790 = vmatpush1.msra.mxu0 0.0
    %791 = vmatprep.subr.mxu0 0.0
    %792 = vmatpush1.msra.mxu0 0.0
    %793 = vmatprep.subr.mxu0 0.0
    %794 = vmatpush1.msra.mxu0 0.0
    %795 = vmatprep.subr.mxu0 0.0
    %796 = vmatpush1.msra.mxu0 0.0
    %797 = vmatprep.subr.mxu0 0.0
    %798 = vmatpush1.msra.mxu0 0.0
    %799 = vmatprep.subr.mxu0 0.0
    %800 = vmatpush1.msra.mxu0 0.0
    %801 = vmatprep.subr.mxu0 0.0
    %802 = vmatpush1.msra.mxu0 0.0
    %803 = vmatprep.subr.mxu0 0.0
    %804 = vmatpush1.msra.mxu0 0.0
    %805 = vmatprep.subr.mxu0 0.0
    %806 = vmatpush1.msra.mxu0 0.0
    %807 = vmatprep.subr.mxu0 0.0
    %808 = vmatpush1.msra.mxu0 0.0
    %809 = vmatprep.subr.mxu0 0.0
    %810 = vmatpush1.msra.mxu0 0.0
    %811 = vmatprep.subr.mxu0 0.0
    %812 = vmatpush1.msra.mxu0 0.0
    %813 = vmatprep.subr.mxu0 0.0
    %814 = vmatpush1.msra.mxu0 0.0
    %815 = vmatprep.subr.mxu0 0.0
    %816 = vmatpush1.msra.mxu0 0.0
    %817 = vmatprep.subr.mxu0 0.0
    %818 = vmatpush1.msra.mxu0 0.0
    %819 = vmatprep.subr.mxu0 0.0
    %820 = vmatpush1.msra.mxu0 0.0
    %821 = vmatprep.subr.mxu0 0.0
    %822 = vmatpush1.msra.mxu0 0.0
    %823 = vmatprep.subr.mxu0 0.0
    %824 = vmatpush1.msra.mxu0 0.0
    %825 = vmatprep.subr.mxu0 0.0
    %826 = vmatpush1.msra.mxu0 0.0
    %827 = vmatprep.subr.mxu0 0.0
    %828 = vmatpush1.msra.mxu0 0.0
    %829 = vmatprep.subr.mxu0 0.0
    %830 = vmatpush1.msra.mxu0 0.0
    %831 = vmatprep.subr.mxu0 0.0
    %832 = vmatpush1.msra.mxu0 0.0
    %833 = vmatprep.subr.mxu0 0.0
    %834 = vmatpush1.msra.mxu0 0.0
    %835 = vmatprep.subr.mxu0 0.0
    %836 = vmatpush1.msra.mxu0 0.0
    %837 = vmatprep.subr.mxu0 0.0
    %838 = vmatpush1.msra.mxu0 0.0
    %839 = vmatprep.subr.mxu0 0.0
    %840 = vmatpush1.msra.mxu0 0.0
    %841 = vmatprep.subr.mxu0 0.0
    %842 = vmatpush1.msra.mxu0 0.0
    %843 = vmatprep.mubr.f32.mxu0 0.0
    %844 = vmatmul.mubr.f32.gmra.mrb[0].mxu0 %v679
    %v845 = vpop.f32.mrb[0].mxu0
    %v846 = vadd.f32 %v660, %v845
    %v847 = vpop.f32.mrb[0].mxu0
    %v848 = vadd.f32 %v660, %v847
    %849 = vmatprep.mubr.f32.mxu0 0.0
    %850 = vmatmul.mubr.f32.gmra.mrb[0].mxu0 %v682
    %v851 = vpop.f32.mrb[0].mxu0
    %v852 = vadd.f32 %v665, %v851
    %v853 = vpop.f32.mrb[0].mxu0
    %v854 = vadd.f32 %v665, %v853
    %855 = vmatprep.mubr.f32.mxu0 0.0
    %856 = vmatmul.mubr.f32.gmra.mrb[0].mxu0 %v685
    %v857 = vpop.f32.mrb[0].mxu0
    %v858 = vadd.f32 %v670, %v857
    %v859 = vpop.f32.mrb[0].mxu0
    %v860 = vadd.f32 %v670, %v859
    %861 = vmatprep.mubr.f32.mxu0 0.0
    %862 = vmatmul.mubr.f32.gmra.mrb[0].mxu0 %v688
    %v863 = vpop.f32.mrb[0].mxu0
    %v864 = vadd.f32 %v675, %v863
    %v865 = vpop.f32.mrb[0].mxu0
    %v866 = vadd.f32 %v675, %v865
    %867 = vdwg.mxu0
    %868 = vmatprep.subr.mxu0 %v618
    %869 = vmatpush1.msra.mxu0 %v617
    %870 = vmatprep.subr.mxu0 %v627
    %871 = vmatpush1.msra.mxu0 %v626
    %872 = vmatprep.subr.mxu0 %v636
    %873 = vmatpush1.msra.mxu0 %v635
    %874 = vmatprep.subr.mxu0 %v645
    %875 = vmatpush1.msra.mxu0 %v644
    %876 = vmatprep.subr.mxu0 0.0
    %877 = vmatpush1.msra.mxu0 0.0
    %878 = vmatprep.subr.mxu0 0.0
    %879 = vmatpush1.msra.mxu0 0.0
    %880 = vmatprep.subr.mxu0 0.0
    %881 = vmatpush1.msra.mxu0 0.0
    %882 = vmatprep.subr.mxu0 0.0
    %883 = vmatpush1.msra.mxu0 0.0
    %884 = vmatprep.subr.mxu0 0.0
    %885 = vmatpush1.msra.mxu0 0.0
    %886 = vmatprep.subr.mxu0 0.0
    %887 = vmatpush1.msra.mxu0 0.0
    %888 = vmatprep.subr.mxu0 0.0
    %889 = vmatpush1.msra.mxu0 0.0
    %890 = vmatprep.subr.mxu0 0.0
    %891 = vmatpush1.msra.mxu0 0.0
    %892 = vmatprep.subr.mxu0 0.0
    %893 = vmatpush1.msra.mxu0 0.0
    %894 = vmatprep.subr.mxu0 0.0
    %895 = vmatpush1.msra.mxu0 0.0
    %896 = vmatprep.subr.mxu0 0.0
    %897 = vmatpush1.msra.mxu0 0.0
    %898 = vmatprep.subr.mxu0 0.0
    %899 = vmatpush1.msra.mxu0 0.0
    %900 = vmatprep.subr.mxu0 0.0
    %901 = vmatpush1.msra.mxu0 0.0
    %902 = vmatprep.subr.mxu0 0.0
    %903 = vmatpush1.msra.mxu0 0.0
    %904 = vmatprep.subr.mxu0 0.0
    %905 = vmatpush1.msra.mxu0 0.0
    %906 = vmatprep.subr.mxu0 0.0
    %907 = vmatpush1.msra.mxu0 0.0
    %908 = vmatprep.subr.mxu0 0.0
    %909 = vmatpush1.msra.mxu0 0.0
    %910 = vmatprep.subr.mxu0 0.0
    %911 = vmatpush1.msra.mxu0 0.0
    %912 = vmatprep.subr.mxu0 0.0
    %913 = vmatpush1.msra.mxu0 0.0
    %914 = vmatprep.subr.mxu0 0.0
    %915 = vmatpush1.msra.mxu0 0.0
    %916 = vmatprep.subr.mxu0 0.0
    %917 = vmatpush1.msra.mxu0 0.0
    %918 = vmatprep.subr.mxu0 0.0
    %919 = vmatpush1.msra.mxu0 0.0
    %920 = vmatprep.subr.mxu0 0.0
    %921 = vmatpush1.msra.mxu0 0.0
    %922 = vmatprep.subr.mxu0 0.0
    %923 = vmatpush1.msra.mxu0 0.0
    %924 = vmatprep.subr.mxu0 0.0
    %925 = vmatpush1.msra.mxu0 0.0
    %926 = vmatprep.subr.mxu0 0.0
    %927 = vmatpush1.msra.mxu0 0.0
    %928 = vmatprep.subr.mxu0 0.0
    %929 = vmatpush1.msra.mxu0 0.0
    %930 = vmatprep.subr.mxu0 0.0
    %931 = vmatpush1.msra.mxu0 0.0
    %932 = vmatprep.mubr.f32.mxu0 0.0
    %933 = vmatmul.mubr.f32.gmra.mrb[0].mxu0 %v679
    %v934 = vpop.f32.mrb[0].mxu0
    %v935 = vadd.f32 %v660, %v934
    %v936 = vpop.f32.mrb[0].mxu0
    %v937 = vadd.f32 %v660, %v936
    %938 = vmatprep.mubr.f32.mxu0 0.0
    %939 = vmatmul.mubr.f32.gmra.mrb[0].mxu0 %v682
    %v940 = vpop.f32.mrb[0].mxu0
    %v941 = vadd.f32 %v665, %v940
    %v942 = vpop.f32.mrb[0].mxu0
    %v943 = vadd.f32 %v665, %v942
    %944 = vmatprep.mubr.f32.mxu0 0.0
    %945 = vmatmul.mubr.f32.gmra.mrb[0].mxu0 %v685
    %v946 = vpop.f32.mrb[0].mxu0
    %v947 = vadd.f32 %v670, %v946
    %v948 = vpop.f32.mrb[0].mxu0
    %v949 = vadd.f32 %v670, %v948
    %950 = vmatprep.mubr.f32.mxu0 0.0
    %951 = vmatmul.mubr.f32.gmra.mrb[0].mxu0 %v688
    %v952 = vpop.f32.mrb[0].mxu0
    %v953 = vadd.f32 %v675, %v952
    %v954 = vpop.f32.mrb[0].mxu0
    %v955 = vadd.f32 %v675, %v954
    %956 = vdwg.mxu0
    %957 = vmatprep.subr.mxu0 %v620
    %958 = vmatpush1.msra.mxu0 %v619
    %959 = vmatprep.subr.mxu0 %v629
    %960 = vmatpush1.msra.mxu0 %v628
    %961 = vmatprep.subr.mxu0 %v638
    %962 = vmatpush1.msra.mxu0 %v637
    %963 = vmatprep.subr.mxu0 %v647
    %964 = vmatpush1.msra.mxu0 %v646
    %965 = vmatprep.subr.mxu0 0.0
    %966 = vmatpush1.msra.mxu0 0.0
    %967 = vmatprep.subr.mxu0 0.0
    %968 = vmatpush1.msra.mxu0 0.0
    %969 = vmatprep.subr.mxu0 0.0
    %970 = vmatpush1.msra.mxu0 0.0
    %971 = vmatprep.subr.mxu0 0.0
    %972 = vmatpush1.msra.mxu0 0.0
    %973 = vmatprep.subr.mxu0 0.0
    %974 = vmatpush1.msra.mxu0 0.0
    %975 = vmatprep.subr.mxu0 0.0
    %976 = vmatpush1.msra.mxu0 0.0
    %977 = vmatprep.subr.mxu0 0.0
    %978 = vmatpush1.msra.mxu0 0.0
    %979 = vmatprep.subr.mxu0 0.0
    %980 = vmatpush1.msra.mxu0 0.0
    %981 = vmatprep.subr.mxu0 0.0
    %982 = vmatpush1.msra.mxu0 0.0
    %983 = vmatprep.subr.mxu0 0.0
    %984 = vmatpush1.msra.mxu0 0.0
    %985 = vmatprep.subr.mxu0 0.0
    %986 = vmatpush1.msra.mxu0 0.0
    %987 = vmatprep.subr.mxu0 0.0
    %988 = vmatpush1.msra.mxu0 0.0
    %989 = vmatprep.subr.mxu0 0.0
    %990 = vmatpush1.msra.mxu0 0.0
    %991 = vmatprep.subr.mxu0 0.0
    %992 = vmatpush1.msra.mxu0 0.0
    %993 = vmatprep.subr.mxu0 0.0
    %994 = vmatpush1.msra.mxu0 0.0
    %995 = vmatprep.subr.mxu0 0.0
    %996 = vmatpush1.msra.mxu0 0.0
    %997 = vmatprep.subr.mxu0 0.0
    %998 = vmatpush1.msra.mxu0 0.0
    %999 = vmatprep.subr.mxu0 0.0
    %1000 = vmatpush1.msra.mxu0 0.0
    %1001 = vmatprep.subr.mxu0 0.0
    %1002 = vmatpush1.msra.mxu0 0.0
    %1003 = vmatprep.subr.mxu0 0.0
    %1004 = vmatpush1.msra.mxu0 0.0
    %1005 = vmatprep.subr.mxu0 0.0
    %1006 = vmatpush1.msra.mxu0 0.0
    %1007 = vmatprep.subr.mxu0 0.0
    %1008 = vmatpush1.msra.mxu0 0.0
    %1009 = vmatprep.subr.mxu0 0.0
    %1010 = vmatpush1.msra.mxu0 0.0
    %1011 = vmatprep.subr.mxu0 0.0
    %1012 = vmatpush1.msra.mxu0 0.0
    %1013 = vmatprep.subr.mxu0 0.0
    %1014 = vmatpush1.msra.mxu0 0.0
    %1015 = vmatprep.subr.mxu0 0.0
    %1016 = vmatpush1.msra.mxu0 0.0
    %1017 = vmatprep.subr.mxu0 0.0
    %1018 = vmatpush1.msra.mxu0 0.0
    %1019 = vmatprep.subr.mxu0 0.0
    %1020 = vmatpush1.msra.mxu0 0.0
    %1021 = vmatprep.mubr.f32.mxu0 0.0
    %1022 = vmatmul.mubr.f32.gmra.mrb[0].mxu0 %v679
    %v1023 = vpop.f32.mrb[0].mxu0
    %v1024 = vadd.f32 %v660, %v1023
    %v1025 = vpop.f32.mrb[0].mxu0
    %v1026 = vadd.f32 %v660, %v1025
    %1027 = vmatprep.mubr.f32.mxu0 0.0
    %1028 = vmatmul.mubr.f32.gmra.mrb[0].mxu0 %v682
    %v1029 = vpop.f32.mrb[0].mxu0
    %v1030 = vadd.f32 %v665, %v1029
    %v1031 = vpop.f32.mrb[0].mxu0
    %v1032 = vadd.f32 %v665, %v1031
    %1033 = vmatprep.mubr.f32.mxu0 0.0
    %1034 = vmatmul.mubr.f32.gmra.mrb[0].mxu0 %v685
    %v1035 = vpop.f32.mrb[0].mxu0
    %v1036 = vadd.f32 %v670, %v1035
    %v1037 = vpop.f32.mrb[0].mxu0
    %v1038 = vadd.f32 %v670, %v1037
    %1039 = vmatprep.mubr.f32.mxu0 0.0
    %1040 = vmatmul.mubr.f32.gmra.mrb[0].mxu0 %v688
    %v1041 = vpop.f32.mrb[0].mxu0
    %v1042 = vadd.f32 %v675, %v1041
    %v1043 = vpop.f32.mrb[0].mxu0
    %v1044 = vadd.f32 %v675, %v1043
    %1045 = vdwg.mxu0
    %1046 = vmatprep.subr.mxu0 0.0
    %1047 = vmatpush1.msra.mxu0 %v621
    %1048 = vmatprep.subr.mxu0 0.0
    %1049 = vmatpush1.msra.mxu0 %v630
    %1050 = vmatprep.subr.mxu0 0.0
    %1051 = vmatpush1.msra.mxu0 %v639
    %1052 = vmatprep.subr.mxu0 0.0
    %1053 = vmatpush1.msra.mxu0 %v648
    %1054 = vmatprep.subr.mxu0 0.0
    %1055 = vmatpush1.msra.mxu0 0.0
    %1056 = vmatprep.subr.mxu0 0.0
    %1057 = vmatpush1.msra.mxu0 0.0
    %1058 = vmatprep.subr.mxu0 0.0
    %1059 = vmatpush1.msra.mxu0 0.0
    %1060 = vmatprep.subr.mxu0 0.0
    %1061 = vmatpush1.msra.mxu0 0.0
    %1062 = vmatprep.subr.mxu0 0.0
    %1063 = vmatpush1.msra.mxu0 0.0
    %1064 = vmatprep.subr.mxu0 0.0
    %1065 = vmatpush1.msra.mxu0 0.0
    %1066 = vmatprep.subr.mxu0 0.0
    %1067 = vmatpush1.msra.mxu0 0.0
    %1068 = vmatprep.subr.mxu0 0.0
    %1069 = vmatpush1.msra.mxu0 0.0
    %1070 = vmatprep.subr.mxu0 0.0
    %1071 = vmatpush1.msra.mxu0 0.0
    %1072 = vmatprep.subr.mxu0 0.0
    %1073 = vmatpush1.msra.mxu0 0.0
    %1074 = vmatprep.subr.mxu0 0.0
    %1075 = vmatpush1.msra.mxu0 0.0
    %1076 = vmatprep.subr.mxu0 0.0
    %1077 = vmatpush1.msra.mxu0 0.0
    %1078 = vmatprep.subr.mxu0 0.0
    %1079 = vmatpush1.msra.mxu0 0.0
    %1080 = vmatprep.subr.mxu0 0.0
    %1081 = vmatpush1.msra.mxu0 0.0
    %1082 = vmatprep.subr.mxu0 0.0
    %1083 = vmatpush1.msra.mxu0 0.0
    %1084 = vmatprep.subr.mxu0 0.0
    %1085 = vmatpush1.msra.mxu0 0.0
    %1086 = vmatprep.subr.mxu0 0.0
    %1087 = vmatpush1.msra.mxu0 0.0
    %1088 = vmatprep.subr.mxu0 0.0
    %1089 = vmatpush1.msra.mxu0 0.0
    %1090 = vmatprep.subr.mxu0 0.0
    %1091 = vmatpush1.msra.mxu0 0.0
    %1092 = vmatprep.subr.mxu0 0.0
    %1093 = vmatpush1.msra.mxu0 0.0
    %1094 = vmatprep.subr.mxu0 0.0
    %1095 = vmatpush1.msra.mxu0 0.0
    %1096 = vmatprep.subr.mxu0 0.0
    %1097 = vmatpush1.msra.mxu0 0.0
    %1098 = vmatprep.subr.mxu0 0.0
    %1099 = vmatpush1.msra.mxu0 0.0
    %1100 = vmatprep.subr.mxu0 0.0
    %1101 = vmatpush1.msra.mxu0 0.0
    %1102 = vmatprep.subr.mxu0 0.0
    %1103 = vmatpush1.msra.mxu0 0.0
    %1104 = vmatprep.subr.mxu0 0.0
    %1105 = vmatpush1.msra.mxu0 0.0
    %1106 = vmatprep.subr.mxu0 0.0
    %1107 = vmatpush1.msra.mxu0 0.0
    %1108 = vmatprep.subr.mxu0 0.0
    %1109 = vmatpush1.msra.mxu0 0.0
    %1110 = vmatprep.mubr.f32.mxu0 0.0
    %1111 = vmatmul.mubr.f32.gmra.mrb[0].mxu0 %v679
    %v1112 = vpop.f32.mrb[0].mxu0
    %v1113 = vadd.f32 %v660, %v1112
    %v1114 = vpop.f32.mrb[0].mxu0
    %1115 = vmatprep.mubr.f32.mxu0 0.0
    %1116 = vmatmul.mubr.f32.gmra.mrb[0].mxu0 %v682
    %v1117 = vpop.f32.mrb[0].mxu0
    %v1118 = vadd.f32 %v665, %v1117
    %v1119 = vpop.f32.mrb[0].mxu0
    %1120 = vmatprep.mubr.f32.mxu0 0.0
    %1121 = vmatmul.mubr.f32.gmra.mrb[0].mxu0 %v685
    %v1122 = vpop.f32.mrb[0].mxu0
    %v1123 = vadd.f32 %v670, %v1122
    %v1124 = vpop.f32.mrb[0].mxu0
    %1125 = vmatprep.mubr.f32.mxu0 0.0
    %1126 = vmatmul.mubr.f32.gmra.mrb[0].mxu0 %v688
    %v1127 = vpop.f32.mrb[0].mxu0
    %v1128 = vadd.f32 %v675, %v1127
    %v1129 = vpop.f32.mrb[0].mxu0
    %1130 = vdwg.mxu0
    %vm1131 = vcmp.gt.f32.partialorder %v757, 0.0
    %vm1132 = vcmp.gt.f32.partialorder %v759, 0.0
    %vm1133 = vcmp.gt.f32.partialorder %v846, 0.0
    %vm1134 = vcmp.gt.f32.partialorder %v848, 0.0
    %vm1135 = vcmp.gt.f32.partialorder %v935, 0.0
    %vm1136 = vcmp.gt.f32.partialorder %v937, 0.0
    %vm1137 = vcmp.gt.f32.partialorder %v1024, 0.0
    %vm1138 = vcmp.gt.f32.partialorder %v1026, 0.0
    %vm1139 = vcmp.gt.f32.partialorder %v1113, 0.0
    %vm1140 = vcmp.gt.f32.partialorder %v763, 0.0
    %vm1141 = vcmp.gt.f32.partialorder %v765, 0.0
    %vm1142 = vcmp.gt.f32.partialorder %v852, 0.0
    %vm1143 = vcmp.gt.f32.partialorder %v854, 0.0
    %vm1144 = vcmp.gt.f32.partialorder %v941, 0.0
    %vm1145 = vcmp.gt.f32.partialorder %v943, 0.0
    %vm1146 = vcmp.gt.f32.partialorder %v1030, 0.0
    %vm1147 = vcmp.gt.f32.partialorder %v1032, 0.0
    %vm1148 = vcmp.gt.f32.partialorder %v1118, 0.0
    %vm1149 = vcmp.gt.f32.partialorder %v769, 0.0
    %vm1150 = vcmp.gt.f32.partialorder %v771, 0.0
    %vm1151 = vcmp.gt.f32.partialorder %v858, 0.0
    %vm1152 = vcmp.gt.f32.partialorder %v860, 0.0
    %vm1153 = vcmp.gt.f32.partialorder %v947, 0.0
    %vm1154 = vcmp.gt.f32.partialorder %v949, 0.0
    %vm1155 = vcmp.gt.f32.partialorder %v1036, 0.0
    %vm1156 = vcmp.gt.f32.partialorder %v1038, 0.0
    %vm1157 = vcmp.gt.f32.partialorder %v1123, 0.0
    %vm1158 = vcmp.gt.f32.partialorder %v775, 0.0
    %vm1159 = vcmp.gt.f32.partialorder %v777, 0.0
    %vm1160 = vcmp.gt.f32.partialorder %v864, 0.0
    %vm1161 = vcmp.gt.f32.partialorder %v866, 0.0
    %vm1162 = vcmp.gt.f32.partialorder %v953, 0.0
    %vm1163 = vcmp.gt.f32.partialorder %v955, 0.0
    %vm1164 = vcmp.gt.f32.partialorder %v1042, 0.0
    %vm1165 = vcmp.gt.f32.partialorder %v1044, 0.0
    %vm1166 = vcmp.gt.f32.partialorder %v1128, 0.0
    %v1167 = vmul.f32 %v757, 0.01
    %v1168 = vmul.f32 %v759, 0.01
    %v1169 = vmul.f32 %v846, 0.01
    %v1170 = vmul.f32 %v848, 0.01
    %v1171 = vmul.f32 %v935, 0.01
    %v1172 = vmul.f32 %v937, 0.01
    %v1173 = vmul.f32 %v1024, 0.01
    %v1174 = vmul.f32 %v1026, 0.01
    %v1175 = vmul.f32 %v1113, 0.01
    %v1176 = vmul.f32 %v763, 0.01
    %v1177 = vmul.f32 %v765, 0.01
    %v1178 = vmul.f32 %v852, 0.01
    %v1179 = vmul.f32 %v854, 0.01
    %v1180 = vmul.f32 %v941, 0.01
    %v1181 = vmul.f32 %v943, 0.01
    %v1182 = vmul.f32 %v1030, 0.01
    %v1183 = vmul.f32 %v1032, 0.01
    %v1184 = vmul.f32 %v1118, 0.01
    %v1185 = vmul.f32 %v769, 0.01
    %v1186 = vmul.f32 %v771, 0.01
    %v1187 = vmul.f32 %v858, 0.01
    %v1188 = vmul.f32 %v860, 0.01
    %v1189 = vmul.f32 %v947, 0.01
    %v1190 = vmul.f32 %v949, 0.01
    %v1191 = vmul.f32 %v1036, 0.01
    %v1192 = vmul.f32 %v1038, 0.01
    %v1193 = vmul.f32 %v1123, 0.01
    %v1194 = vmul.f32 %v775, 0.01
    %v1195 = vmul.f32 %v777, 0.01
    %v1196 = vmul.f32 %v864, 0.01
    %v1197 = vmul.f32 %v866, 0.01
    %v1198 = vmul.f32 %v953, 0.01
    %v1199 = vmul.f32 %v955, 0.01
    %v1200 = vmul.f32 %v1042, 0.01
    %v1201 = vmul.f32 %v1044, 0.01
    %v1202 = vmul.f32 %v1128, 0.01
    %v1203 = vsel %vm1131, %v757, %v1167
    %v1204 = vsel %vm1132, %v759, %v1168
    %v1205 = vsel %vm1133, %v846, %v1169
    %v1206 = vsel %vm1134, %v848, %v1170
    %v1207 = vsel %vm1135, %v935, %v1171
    %v1208 = vsel %vm1136, %v937, %v1172
    %v1209 = vsel %vm1137, %v1024, %v1173
    %v1210 = vsel %vm1138, %v1026, %v1174
    %v1211 = vsel %vm1139, %v1113, %v1175
    %v1212 = vsel %vm1140, %v763, %v1176
    %v1213 = vsel %vm1141, %v765, %v1177
    %v1214 = vsel %vm1142, %v852, %v1178
    %v1215 = vsel %vm1143, %v854, %v1179
    %v1216 = vsel %vm1144, %v941, %v1180
    %v1217 = vsel %vm1145, %v943, %v1181
    %v1218 = vsel %vm1146, %v1030, %v1182
    %v1219 = vsel %vm1147, %v1032, %v1183
    %v1220 = vsel %vm1148, %v1118, %v1184
    %v1221 = vsel %vm1149, %v769, %v1185
    %v1222 = vsel %vm1150, %v771, %v1186
    %v1223 = vsel %vm1151, %v858, %v1187
    %v1224 = vsel %vm1152, %v860, %v1188
    %v1225 = vsel %vm1153, %v947, %v1189
    %v1226 = vsel %vm1154, %v949, %v1190
    %v1227 = vsel %vm1155, %v1036, %v1191
    %v1228 = vsel %vm1156, %v1038, %v1192
    %v1229 = vsel %vm1157, %v1123, %v1193
    %v1230 = vsel %vm1158, %v775, %v1194
    %v1231 = vsel %vm1159, %v777, %v1195
    %v1232 = vsel %vm1160, %v864, %v1196
    %v1233 = vsel %vm1161, %v866, %v1197
    %v1234 = vsel %vm1162, %v953, %v1198
    %v1235 = vsel %vm1163, %v955, %v1199
    %v1236 = vsel %vm1164, %v1042, %v1200
    %v1237 = vsel %vm1165, %v1044, %v1201
    %v1238 = vsel %vm1166, %v1128, %v1202
    %v1239 = vld [vmem:[%s5] sm:$0xf]
    %v1240 = vld [vmem:[%s6] sm:$0xf]
    %1242 = vset.pattern.permute.xlu0 0
    %1243 = vperm.xlu0 %1242, %v1240
    %v1244 = vpop.permute.xlu0 %1243
    %v1247 = vsel %vm677, %v1239, 0
    %1249 = vmatprep.subr.mxu0 %v1204
    %1250 = vmatpush1.msra.mxu0 %v1203
    %1251 = vmatprep.subr.mxu0 %v1213
    %1252 = vmatpush1.msra.mxu0 %v1212
    %1253 = vmatprep.subr.mxu0 %v1222
    %1254 = vmatpush1.msra.mxu0 %v1221
    %1255 = vmatprep.subr.mxu0 %v1231
    %1256 = vmatpush1.msra.mxu0 %v1230
    %1257 = vmatprep.subr.mxu0 0.0
    %1258 = vmatpush1.msra.mxu0 0.0
    %1259 = vmatprep.subr.mxu0 0.0
    %1260 = vmatpush1.msra.mxu0 0.0
    %1261 = vmatprep.subr.mxu0 0.0
    %1262 = vmatpush1.msra.mxu0 0.0
    %1263 = vmatprep.subr.mxu0 0.0
    %1264 = vmatpush1.msra.mxu0 0.0
    %1265 = vmatprep.subr.mxu0 0.0
    %1266 = vmatpush1.msra.mxu0 0.0
    %1267 = vmatprep.subr.mxu0 0.0
    %1268 = vmatpush1.msra.mxu0 0.0
    %1269 = vmatprep.subr.mxu0 0.0
    %1270 = vmatpush1.msra.mxu0 0.0
    %1271 = vmatprep.subr.mxu0 0.0
    %1272 = vmatpush1.msra.mxu0 0.0
    %1273 = vmatprep.subr.mxu0 0.0
    %1274 = vmatpush1.msra.mxu0 0.0
    %1275 = vmatprep.subr.mxu0 0.0
    %1276 = vmatpush1.msra.mxu0 0.0
    %1277 = vmatprep.subr.mxu0 0.0
    %1278 = vmatpush1.msra.mxu0 0.0
    %1279 = vmatprep.subr.mxu0 0.0
    %1280 = vmatpush1.msra.mxu0 0.0
    %1281 = vmatprep.subr.mxu0 0.0
    %1282 = vmatpush1.msra.mxu0 0.0
    %1283 = vmatprep.subr.mxu0 0.0
    %1284 = vmatpush1.msra.mxu0 0.0
    %1285 = vmatprep.subr.mxu0 0.0
    %1286 = vmatpush1.msra.mxu0 0.0
    %1287 = vmatprep.subr.mxu0 0.0
    %1288 = vmatpush1.msra.mxu0 0.0
    %1289 = vmatprep.subr.mxu0 0.0
    %1290 = vmatpush1.msra.mxu0 0.0
    %1291 = vmatprep.subr.mxu0 0.0
    %1292 = vmatpush1.msra.mxu0 0.0
    %1293 = vmatprep.subr.mxu0 0.0
    %1294 = vmatpush1.msra.mxu0 0.0
    %1295 = vmatprep.subr.mxu0 0.0
    %1296 = vmatpush1.msra.mxu0 0.0
    %1297 = vmatprep.subr.mxu0 0.0
    %1298 = vmatpush1.msra.mxu0 0.0
    %1299 = vmatprep.subr.mxu0 0.0
    %1300 = vmatpush1.msra.mxu0 0.0
    %1301 = vmatprep.subr.mxu0 0.0
    %1302 = vmatpush1.msra.mxu0 0.0
    %1303 = vmatprep.subr.mxu0 0.0
    %1304 = vmatpush1.msra.mxu0 0.0
    %1305 = vmatprep.subr.mxu0 0.0
    %1306 = vmatpush1.msra.mxu0 0.0
    %1307 = vmatprep.subr.mxu0 0.0
    %1308 = vmatpush1.msra.mxu0 0.0
    %1309 = vmatprep.subr.mxu0 0.0
    %1310 = vmatpush1.msra.mxu0 0.0
    %1311 = vmatprep.subr.mxu0 0.0
    %1312 = vmatpush1.msra.mxu0 0.0
    %1313 = vmatprep.mubr.f32.mxu0 0.0
    %1314 = vmatmul.mubr.f32.gmra.mrb[0].mxu0 %v1247
    %v1315 = vpop.f32.mrb[0].mxu0
    %v1316 = vadd.f32 %v1244, %v1315
    %v1317 = vpop.f32.mrb[0].mxu0
    %v1318 = vadd.f32 %v1244, %v1317
    %1319 = vdwg.mxu0
    %1320 = vmatprep.subr.mxu0 %v1206
    %1321 = vmatpush1.msra.mxu0 %v1205
    %1322 = vmatprep.subr.mxu0 %v1215
    %1323 = vmatpush1.msra.mxu0 %v1214
    %1324 = vmatprep.subr.mxu0 %v1224
    %1325 = vmatpush1.msra.mxu0 %v1223
    %1326 = vmatprep.subr.mxu0 %v1233
    %1327 = vmatpush1.msra.mxu0 %v1232
    %1328 = vmatprep.subr.mxu0 0.0
    %1329 = vmatpush1.msra.mxu0 0.0
    %1330 = vmatprep.subr.mxu0 0.0
    %1331 = vmatpush1.msra.mxu0 0.0
    %1332 = vmatprep.subr.mxu0 0.0
    %1333 = vmatpush1.msra.mxu0 0.0
    %1334 = vmatprep.subr.mxu0 0.0
    %1335 = vmatpush1.msra.mxu0 0.0
    %1336 = vmatprep.subr.mxu0 0.0
    %1337 = vmatpush1.msra.mxu0 0.0
    %1338 = vmatprep.subr.mxu0 0.0
    %1339 = vmatpush1.msra.mxu0 0.0
    %1340 = vmatprep.subr.mxu0 0.0
    %1341 = vmatpush1.msra.mxu0 0.0
    %1342 = vmatprep.subr.mxu0 0.0
    %1343 = vmatpush1.msra.mxu0 0.0
    %1344 = vmatprep.subr.mxu0 0.0
    %1345 = vmatpush1.msra.mxu0 0.0
    %1346 = vmatprep.subr.mxu0 0.0
    %1347 = vmatpush1.msra.mxu0 0.0
    %1348 = vmatprep.subr.mxu0 0.0
    %1349 = vmatpush1.msra.mxu0 0.0
    %1350 = vmatprep.subr.mxu0 0.0
    %1351 = vmatpush1.msra.mxu0 0.0
    %1352 = vmatprep.subr.mxu0 0.0
    %1353 = vmatpush1.msra.mxu0 0.0
    %1354 = vmatprep.subr.mxu0 0.0
    %1355 = vmatpush1.msra.mxu0 0.0
    %1356 = vmatprep.subr.mxu0 0.0
    %1357 = vmatpush1.msra.mxu0 0.0
    %1358 = vmatprep.subr.mxu0 0.0
    %1359 = vmatpush1.msra.mxu0 0.0
    %1360 = vmatprep.subr.mxu0 0.0
    %1361 = vmatpush1.msra.mxu0 0.0
    %1362 = vmatprep.subr.mxu0 0.0
    %1363 = vmatpush1.msra.mxu0 0.0
    %1364 = vmatprep.subr.mxu0 0.0
    %1365 = vmatpush1.msra.mxu0 0.0
    %1366 = vmatprep.subr.mxu0 0.0
    %1367 = vmatpush1.msra.mxu0 0.0
    %1368 = vmatprep.subr.mxu0 0.0
    %1369 = vmatpush1.msra.mxu0 0.0
    %1370 = vmatprep.subr.mxu0 0.0
    %1371 = vmatpush1.msra.mxu0 0.0
    %1372 = vmatprep.subr.mxu0 0.0
    %1373 = vmatpush1.msra.mxu0 0.0
    %1374 = vmatprep.subr.mxu0 0.0
    %1375 = vmatpush1.msra.mxu0 0.0
    %1376 = vmatprep.subr.mxu0 0.0
    %1377 = vmatpush1.msra.mxu0 0.0
    %1378 = vmatprep.subr.mxu0 0.0
    %1379 = vmatpush1.msra.mxu0 0.0
    %1380 = vmatprep.subr.mxu0 0.0
    %1381 = vmatpush1.msra.mxu0 0.0
    %1382 = vmatprep.subr.mxu0 0.0
    %1383 = vmatpush1.msra.mxu0 0.0
    %1384 = vmatprep.mubr.f32.mxu0 0.0
    %1385 = vmatmul.mubr.f32.gmra.mrb[0].mxu0 %v1247
    %v1386 = vpop.f32.mrb[0].mxu0
    %v1387 = vadd.f32 %v1244, %v1386
    %v1388 = vpop.f32.mrb[0].mxu0
    %v1389 = vadd.f32 %v1244, %v1388
    %1390 = vdwg.mxu0
    %1391 = vmatprep.subr.mxu0 %v1208
    %1392 = vmatpush1.msra.mxu0 %v1207
    %1393 = vmatprep.subr.mxu0 %v1217
    %1394 = vmatpush1.msra.mxu0 %v1216
    %1395 = vmatprep.subr.mxu0 %v1226
    %1396 = vmatpush1.msra.mxu0 %v1225
    %1397 = vmatprep.subr.mxu0 %v1235
    %1398 = vmatpush1.msra.mxu0 %v1234
    %1399 = vmatprep.subr.mxu0 0.0
    %1400 = vmatpush1.msra.mxu0 0.0
    %1401 = vmatprep.subr.mxu0 0.0
    %1402 = vmatpush1.msra.mxu0 0.0
    %1403 = vmatprep.subr.mxu0 0.0
    %1404 = vmatpush1.msra.mxu0 0.0
    %1405 = vmatprep.subr.mxu0 0.0
    %1406 = vmatpush1.msra.mxu0 0.0
    %1407 = vmatprep.subr.mxu0 0.0
    %1408 = vmatpush1.msra.mxu0 0.0
    %1409 = vmatprep.subr.mxu0 0.0
    %1410 = vmatpush1.msra.mxu0 0.0
    %1411 = vmatprep.subr.mxu0 0.0
    %1412 = vmatpush1.msra.mxu0 0.0
    %1413 = vmatprep.subr.mxu0 0.0
    %1414 = vmatpush1.msra.mxu0 0.0
    %1415 = vmatprep.subr.mxu0 0.0
    %1416 = vmatpush1.msra.mxu0 0.0
    %1417 = vmatprep.subr.mxu0 0.0
    %1418 = vmatpush1.msra.mxu0 0.0
    %1419 = vmatprep.subr.mxu0 0.0
    %1420 = vmatpush1.msra.mxu0 0.0
    %1421 = vmatprep.subr.mxu0 0.0
    %1422 = vmatpush1.msra.mxu0 0.0
    %1423 = vmatprep.subr.mxu0 0.0
    %1424 = vmatpush1.msra.mxu0 0.0
    %1425 = vmatprep.subr.mxu0 0.0
    %1426 = vmatpush1.msra.mxu0 0.0
    %1427 = vmatprep.subr.mxu0 0.0
    %1428 = vmatpush1.msra.mxu0 0.0
    %1429 = vmatprep.subr.mxu0 0.0
    %1430 = vmatpush1.msra.mxu0 0.0
    %1431 = vmatprep.subr.mxu0 0.0
    %1432 = vmatpush1.msra.mxu0 0.0
    %1433 = vmatprep.subr.mxu0 0.0
    %1434 = vmatpush1.msra.mxu0 0.0
    %1435 = vmatprep.subr.mxu0 0.0
    %1436 = vmatpush1.msra.mxu0 0.0
    %1437 = vmatprep.subr.mxu0 0.0
    %1438 = vmatpush1.msra.mxu0 0.0
    %1439 = vmatprep.subr.mxu0 0.0
    %1440 = vmatpush1.msra.mxu0 0.0
    %1441 = vmatprep.subr.mxu0 0.0
    %1442 = vmatpush1.msra.mxu0 0.0
    %1443 = vmatprep.subr.mxu0 0.0
    %1444 = vmatpush1.msra.mxu0 0.0
    %1445 = vmatprep.subr.mxu0 0.0
    %1446 = vmatpush1.msra.mxu0 0.0
    %1447 = vmatprep.subr.mxu0 0.0
    %1448 = vmatpush1.msra.mxu0 0.0
    %1449 = vmatprep.subr.mxu0 0.0
    %1450 = vmatpush1.msra.mxu0 0.0
    %1451 = vmatprep.subr.mxu0 0.0
    %1452 = vmatpush1.msra.mxu0 0.0
    %1453 = vmatprep.subr.mxu0 0.0
    %1454 = vmatpush1.msra.mxu0 0.0
    %1455 = vmatprep.mubr.f32.mxu0 0.0
    %1456 = vmatmul.mubr.f32.gmra.mrb[0].mxu0 %v1247
    %v1457 = vpop.f32.mrb[0].mxu0
    %v1458 = vadd.f32 %v1244, %v1457
    %v1459 = vpop.f32.mrb[0].mxu0
    %v1460 = vadd.f32 %v1244, %v1459
    %1461 = vdwg.mxu0
    %1462 = vmatprep.subr.mxu0 %v1210
    %1463 = vmatpush1.msra.mxu0 %v1209
    %1464 = vmatprep.subr.mxu0 %v1219
    %1465 = vmatpush1.msra.mxu0 %v1218
    %1466 = vmatprep.subr.mxu0 %v1228
    %1467 = vmatpush1.msra.mxu0 %v1227
    %1468 = vmatprep.subr.mxu0 %v1237
    %1469 = vmatpush1.msra.mxu0 %v1236
    %1470 = vmatprep.subr.mxu0 0.0
    %1471 = vmatpush1.msra.mxu0 0.0
    %1472 = vmatprep.subr.mxu0 0.0
    %1473 = vmatpush1.msra.mxu0 0.0
    %1474 = vmatprep.subr.mxu0 0.0
    %1475 = vmatpush1.msra.mxu0 0.0
    %1476 = vmatprep.subr.mxu0 0.0
    %1477 = vmatpush1.msra.mxu0 0.0
    %1478 = vmatprep.subr.mxu0 0.0
    %1479 = vmatpush1.msra.mxu0 0.0
    %1480 = vmatprep.subr.mxu0 0.0
    %1481 = vmatpush1.msra.mxu0 0.0
    %1482 = vmatprep.subr.mxu0 0.0
    %1483 = vmatpush1.msra.mxu0 0.0
    %1484 = vmatprep.subr.mxu0 0.0
    %1485 = vmatpush1.msra.mxu0 0.0
    %1486 = vmatprep.subr.mxu0 0.0
    %1487 = vmatpush1.msra.mxu0 0.0
    %1488 = vmatprep.subr.mxu0 0.0
    %1489 = vmatpush1.msra.mxu0 0.0
    %1490 = vmatprep.subr.mxu0 0.0
    %1491 = vmatpush1.msra.mxu0 0.0
    %1492 = vmatprep.subr.mxu0 0.0
    %1493 = vmatpush1.msra.mxu0 0.0
    %1494 = vmatprep.subr.mxu0 0.0
    %1495 = vmatpush1.msra.mxu0 0.0
    %1496 = vmatprep.subr.mxu0 0.0
    %1497 = vmatpush1.msra.mxu0 0.0
    %1498 = vmatprep.subr.mxu0 0.0
    %1499 = vmatpush1.msra.mxu0 0.0
    %1500 = vmatprep.subr.mxu0 0.0
    %1501 = vmatpush1.msra.mxu0 0.0
    %1502 = vmatprep.subr.mxu0 0.0
    %1503 = vmatpush1.msra.mxu0 0.0
    %1504 = vmatprep.subr.mxu0 0.0
    %1505 = vmatpush1.msra.mxu0 0.0
    %1506 = vmatprep.subr.mxu0 0.0
    %1507 = vmatpush1.msra.mxu0 0.0
    %1508 = vmatprep.subr.mxu0 0.0
    %1509 = vmatpush1.msra.mxu0 0.0
    %1510 = vmatprep.subr.mxu0 0.0
    %1511 = vmatpush1.msra.mxu0 0.0
    %1512 = vmatprep.subr.mxu0 0.0
    %1513 = vmatpush1.msra.mxu0 0.0
    %1514 = vmatprep.subr.mxu0 0.0
    %1515 = vmatpush1.msra.mxu0 0.0
    %1516 = vmatprep.subr.mxu0 0.0
    %1517 = vmatpush1.msra.mxu0 0.0
    %1518 = vmatprep.subr.mxu0 0.0
    %1519 = vmatpush1.msra.mxu0 0.0
    %1520 = vmatprep.subr.mxu0 0.0
    %1521 = vmatpush1.msra.mxu0 0.0
    %1522 = vmatprep.subr.mxu0 0.0
    %1523 = vmatpush1.msra.mxu0 0.0
    %1524 = vmatprep.subr.mxu0 0.0
    %1525 = vmatpush1.msra.mxu0 0.0
    %1526 = vmatprep.mubr.f32.mxu0 0.0
    %1527 = vmatmul.mubr.f32.gmra.mrb[0].mxu0 %v1247
    %v1528 = vpop.f32.mrb[0].mxu0
    %v1529 = vadd.f32 %v1244, %v1528
    %v1530 = vpop.f32.mrb[0].mxu0
    %v1531 = vadd.f32 %v1244, %v1530
    %1532 = vdwg.mxu0
    %1533 = vmatprep.subr.mxu0 0.0
    %1534 = vmatpush1.msra.mxu0 %v1211
    %1535 = vmatprep.subr.mxu0 0.0
    %1536 = vmatpush1.msra.mxu0 %v1220
    %1537 = vmatprep.subr.mxu0 0.0
    %1538 = vmatpush1.msra.mxu0 %v1229
    %1539 = vmatprep.subr.mxu0 0.0
    %1540 = vmatpush1.msra.mxu0 %v1238
    %1541 = vmatprep.subr.mxu0 0.0
    %1542 = vmatpush1.msra.mxu0 0.0
    %1543 = vmatprep.subr.mxu0 0.0
    %1544 = vmatpush1.msra.mxu0 0.0
    %1545 = vmatprep.subr.mxu0 0.0
    %1546 = vmatpush1.msra.mxu0 0.0
    %1547 = vmatprep.subr.mxu0 0.0
    %1548 = vmatpush1.msra.mxu0 0.0
    %1549 = vmatprep.subr.mxu0 0.0
    %1550 = vmatpush1.msra.mxu0 0.0
    %1551 = vmatprep.subr.mxu0 0.0
    %1552 = vmatpush1.msra.mxu0 0.0
    %1553 = vmatprep.subr.mxu0 0.0
    %1554 = vmatpush1.msra.mxu0 0.0
    %1555 = vmatprep.subr.mxu0 0.0
    %1556 = vmatpush1.msra.mxu0 0.0
    %1557 = vmatprep.subr.mxu0 0.0
    %1558 = vmatpush1.msra.mxu0 0.0
    %1559 = vmatprep.subr.mxu0 0.0
    %1560 = vmatpush1.msra.mxu0 0.0
    %1561 = vmatprep.subr.mxu0 0.0
    %1562 = vmatpush1.msra.mxu0 0.0
    %1563 = vmatprep.subr.mxu0 0.0
    %1564 = vmatpush1.msra.mxu0 0.0
    %1565 = vmatprep.subr.mxu0 0.0
    %1566 = vmatpush1.msra.mxu0 0.0
    %1567 = vmatprep.subr.mxu0 0.0
    %1568 = vmatpush1.msra.mxu0 0.0
    %1569 = vmatprep.subr.mxu0 0.0
    %1570 = vmatpush1.msra.mxu0 0.0
    %1571 = vmatprep.subr.mxu0 0.0
    %1572 = vmatpush1.msra.mxu0 0.0
    %1573 = vmatprep.subr.mxu0 0.0
    %1574 = vmatpush1.msra.mxu0 0.0
    %1575 = vmatprep.subr.mxu0 0.0
    %1576 = vmatpush1.msra.mxu0 0.0
    %1577 = vmatprep.subr.mxu0 0.0
    %1578 = vmatpush1.msra.mxu0 0.0
    %1579 = vmatprep.subr.mxu0 0.0
    %1580 = vmatpush1.msra.mxu0 0.0
    %1581 = vmatprep.subr.mxu0 0.0
    %1582 = vmatpush1.msra.mxu0 0.0
    %1583 = vmatprep.subr.mxu0 0.0
    %1584 = vmatpush1.msra.mxu0 0.0
    %1585 = vmatprep.subr.mxu0 0.0
    %1586 = vmatpush1.msra.mxu0 0.0
    %1587 = vmatprep.subr.mxu0 0.0
    %1588 = vmatpush1.msra.mxu0 0.0
    %1589 = vmatprep.subr.mxu0 0.0
    %1590 = vmatpush1.msra.mxu0 0.0
    %1591 = vmatprep.subr.mxu0 0.0
    %1592 = vmatpush1.msra.mxu0 0.0
    %1593 = vmatprep.subr.mxu0 0.0
    %1594 = vmatpush1.msra.mxu0 0.0
    %1595 = vmatprep.subr.mxu0 0.0
    %1596 = vmatpush1.msra.mxu0 0.0
    %1597 = vmatprep.mubr.f32.mxu0 0.0
    %1598 = vmatmul.mubr.f32.gmra.mrb[0].mxu0 %v1247
    %v1599 = vpop.f32.mrb[0].mxu0
    %v1600 = vadd.f32 %v1244, %v1599
    %v1601 = vpop.f32.mrb[0].mxu0
    %1602 = vdwg.mxu0
    %v1611 = vcombine.low %v1316, %v1318
    %v1612 = vcombine.low %v1387, %v1389
    %v1613 = vcombine.low %v1458, %v1460
    %v1614 = vcombine.low %v1529, %v1531
    %1619 = vst [vmem:[#allocation5] sm:$0xff] %v1611
    %1620 = vst [vmem:[#allocation5 + $0x8] sm:$0xff] %v1612
    %1621 = vst [vmem:[#allocation5 + $0x10] sm:$0xff] %v1613
    %1622 = vst [vmem:[#allocation5 + $0x18] sm:$0xff] %v1614
    %1623 = vst [vmem:[#allocation5 + $0x20] sm:$0xf] %v1600
    // Predicated region
    $region34: #{tpu_custom_call.1} parent=1 // pred_check
      _
    $region35: #{tpu_custom_call.1} parent=1 // pred_check_branch
      %1625 = sbr.rel (0) target = $region37
    $region36: #{tpu_custom_call.1} parent=1 // pred_region
      %s1627 = ssub.s32 576, 576
      %1628 = vsyncadd [#allocation4], %s1627
      %s1630 = sshll.u32 [#allocation5], 4
      %s1631 = int_to_ptr.vmem [resolvable:$true] %s1630
      %1633 = dma.vmem_to_hbm [thread:$0]  %s1631, 576, %s7, [#allocation4]
    $region37: #{tpu_custom_call.1} parent=1 // pred_fallthru
      _
    // Predicated region
    $region38: #{tpu_custom_call.1} parent=1 // pred_check
      _
    $region39: #{tpu_custom_call.1} parent=1 // pred_check_branch
      %1635 = sbr.rel (0) target = $region41
    $region40: #{tpu_custom_call.1} parent=1 // pred_region
      %1636 = dma.done [#allocation4], 576
    $region41: #{tpu_custom_call.1} parent=1 // pred_fallthru
      _
    %1637 = vsyncpa [#allocation3], 1
    %1638 = vsyncpa [#allocation4], 1

</llo_original>
